<compile_context>
chip_gen: v7x
topology: tpu7x:2x2x1
jax: 0.10.0
libtpu: 0.0.40
codegen_flags: <defaults>
</compile_context>

<pallas_src>
import functools

import jax
import jax.numpy as jnp
from jax import lax
from jax.experimental import pallas as pl
from jax.experimental.pallas import tpu as pltpu


def _round_up(x, m):
    return -(-x // m) * m


def _vmem_capacity_bytes():
    """Best-effort per-generation VMEM capacity (bytes per TensorCore)."""
    try:
        cap = getattr(pltpu.get_tpu_info(), "vmem_capacity_bytes", None)
        if cap:
            return int(cap)
    except Exception:
        pass
    try:
        kind = jax.devices()[0].device_kind.lower()
        if "v7" in kind:
            return 64 << 20                      # v7x: 64 MiB / TC
        if any(k in kind for k in ("v3", "v4", "v5", "v6")):
            return 128 << 20                     # v5e / v6e: 128 MiB
    except Exception:
        pass
    return 64 << 20                              # conservative default


def _tile_vmem_bytes(TH, W, C2, F, io_itemsize):
    """Rough double-buffered per-grid-step VMEM working set for a TH-row tile."""
    KCp = _round_up(9 * C2, 8)
    LOCALp = _round_up((TH + 2) * W + 2, 128)
    THW = TH * W
    dbl = 2
    io_tiles = dbl * (KCp * LOCALp * 2                     # xa tile (bf16)
                      + C2 * THW * (2 * io_itemsize + 4)   # xb + out + addt
                      + 9 * THW * 2)                       # tap masks (bf16)
    weights = dbl * (2 * (F * KCp + F * F + 9 * C2 * F) + 4 * 2 * F)
    inter = 12 * F * LOCALp + 2 * F * THW + 8 * C2 * THW   # h1/h2 (+f32 temps)
    return io_tiles + weights + inter


def _pick_row_tile(B, H, W, C2, F, io_itemsize, vmem_budget):
    """Largest TH dividing H with TH*W % 128 == 0 that fits the VMEM budget."""
    cands = [t for t in range(1, H + 1) if H % t == 0 and (t * W) % 128 == 0]
    if not cands:
        cands = [H]
    # v7x has 2 TensorCores: keep >= 2 grid steps when B == 1 if possible.
    pref = [t for t in cands if not (B == 1 and H // t < 2)] or cands
    fitting = [t for t in pref
               if _tile_vmem_bytes(t, W, C2, F, io_itemsize) <= vmem_budget]
    if fitting:
        return max(fitting)
    return min(pref)      # best effort if nothing fits


def _affine_coupling_kernel(xa_ref, xb_ref, w1_ref, b1_ref, w2_ref, b2_ref,
                            w3_ref, mask_ref, addt_ref, out_ref, *, TH, W):
    THW = TH * W

    # ---- conv1: 3x3 pad=1 as ONE im2col matmul (K = KCp) on the MXU ---------
    xa = xa_ref[0, 0]                                    # (KCp, LOCALp) bf16
    h1 = jnp.dot(w1_ref[...], xa, preferred_element_type=jnp.float32)
    h1 = jnp.maximum(h1 + b1_ref[...], 0.0).astype(jnp.bfloat16)   # (F, LOCALp)

    # ---- conv2: 1x1 conv == (F, F) matmul; ReLU output kept bf16 ------------
    h2 = jnp.dot(w2_ref[...], h1, preferred_element_type=jnp.float32)
    h2 = jnp.maximum(h2 + b2_ref[...], 0.0).astype(jnp.bfloat16)   # (F, LOCALp)

    # ---- ZeroConv2d 3x3: zero-pad part as 9 chained MXU accumulations -------
    # value-1 border + conv bias + exp(3*scale) are folded into addt_ref /
    # w3_ref by the wrapper; mask zeroes out-of-image tap reads (0/1, exact
    # in bf16), applied to the tap so the dots accumulate directly.
    acc = addt_ref[...]                                  # (C2, THW) fp32
    for k in range(9):
        dy, dx = divmod(k, 3)
        off = dy * W + dx
        tap = h2[:, off:off + THW] * mask_ref[k]         # (F, THW) bf16
        acc = acc + jnp.dot(w3_ref[k], tap, preferred_element_type=jnp.float32)

    # ---- additive coupling: lane-dense (C2, TH*W) store, single cast --------
    out_ref[0] = (xb_ref[0].astype(jnp.float32) + acc).astype(out_ref.dtype)


def affine_coupling_forward(x_nchw, params, *, row_tile=None):
    """Forward pass of AffineCoupling.  x_nchw: (B, C, H, W)."""
    w1, b1, w2, b2, w3, b3, scale = params
    B, C, H, W = x_nchw.shape
    C2 = C // 2
    F = w1.shape[3]
    HW = H * W
    KC = 9 * C2
    KCp = _round_up(KC, 8)

    io_itemsize = jnp.dtype(x_nchw.dtype).itemsize
    vmem_cap = _vmem_capacity_bytes()
    vmem_limit = int(min(96 << 20, max(32 << 20, vmem_cap - (16 << 20))))

    TH = (_pick_row_tile(B, H, W, C2, F, io_itemsize, int(0.7 * vmem_limit))
          if row_tile is None else row_tile)
    assert H % TH == 0
    NR = H // TH
    THW = TH * W
    LOCAL = (TH + 2) * W + 2          # (TH + 2 halo rows)*W + 1 element/side
    LOCALp = _round_up(LOCAL, 128)    # lane-aligned xa tiles

    x_a = x_nchw[:, :C2]
    x_b_flat = x_nchw[:, C2:].reshape(B, C2, HW)          # native dtype, no cast

    # ---- im2col of x_a for conv1 (channel-major, lane-dense spatial axis) ---
    x_a_p = jnp.pad(x_a, ((0, 0), (0, 0), (1, 1), (1, 1)))            # zero pad
    taps = [x_a_p[:, :, dy:dy + H, dx:dx + W]
            for dy in range(3) for dx in range(3)]
    xa_col = jnp.stack(taps, axis=1).reshape(B, KC, HW)
    xa_col = jnp.pad(xa_col, ((0, 0), (0, KCp - KC), (0, 0)))          # K -> 8n
    # one dummy halo row (W) + 1 extra element/side so every row tile reads its
    # (TH+2)-row window with the fixed off = dy*W + dx tap formula in-kernel.
    xa_col = jnp.pad(xa_col, ((0, 0), (0, 0), (W + 1, W + 1)))
    xa_tiles = jnp.stack([xa_col[:, :, r * THW: r * THW + LOCAL]
                          for r in range(NR)], axis=1)    # (B, NR, KCp, LOCAL)
    xa_tiles = jnp.pad(xa_tiles, ((0, 0), (0, 0), (0, 0), (0, LOCALp - LOCAL)))
    xa_tiles = xa_tiles.astype(jnp.bfloat16)              # bf16 MXU operand
    # TODO(synk): avoid materializing overlapping row-tile windows in HBM
    # (element-offset BlockSpec / manual DMA); minor now that TH is large.

    # ---- weights, channel-major, bf16 for the MXU ----------------------------
    w1t = jnp.transpose(w1, (3, 0, 1, 2)).reshape(F, KC)
    w1t = jnp.pad(w1t, ((0, 0), (0, KCp - KC))).astype(jnp.bfloat16)
    b1c = b1.reshape(F, 1).astype(jnp.float32)
    w2t = jnp.transpose(w2, (1, 0)).astype(jnp.bfloat16)  # (F_out, F_in)
    b2c = b2.reshape(F, 1).astype(jnp.float32)

    # fold exp(3*scale) into the ZeroConv2d weights (hoisted out of the kernel)
    exp3s = jnp.exp(3.0 * scale.reshape(C2)).astype(jnp.float32)
    w3s = w3 * exp3s.reshape(1, 1, 1, C2)
    w3t = jnp.transpose(w3s, (0, 1, 3, 2)).reshape(9, C2, F).astype(jnp.bfloat16)

    # value-1 padding handled by linearity: border correction (+ bias), scaled,
    # plus per-tap validity masks for the zero-pad part.
    yy = jnp.arange(H).reshape(H, 1)
    xx = jnp.arange(W).reshape(1, W)
    w3sum = jnp.sum(w3, axis=2)                            # (3, 3, C2)
    border = jnp.zeros((H, W, C2), jnp.float32)
    mask_list = []
    for dy in range(3):
        for dx in range(3):
            inside = ((yy + dy - 1 >= 0) & (yy + dy - 1 < H) &
                      (xx + dx - 1 >= 0) & (xx + dx - 1 < W))
            inside_f = inside.astype(jnp.float32)
            mask_list.append(inside_f)
            border = border + ((1.0 - inside_f)[:, :, None]
                               * w3sum[dy, dx][None, None, :])
    tap_mask = jnp.stack(mask_list, axis=0).reshape(9, 1, HW).astype(jnp.bfloat16)
    addt = (border + b3.reshape(1, 1, C2)) * exp3s.reshape(1, 1, C2)
    addt = jnp.transpose(addt, (2, 0, 1)).reshape(C2, HW).astype(jnp.float32)

    flops = int(2 * B * NR * (LOCALp * (KCp * F + F * F) + 9 * THW * F * C2))
    bytes_accessed = int(
        xa_tiles.size * 2 + 2 * B * C2 * HW * io_itemsize
        + (w1t.size + w2t.size + w3t.size + tap_mask.size) * 2
        + (b1c.size + b2c.size + addt.size) * 4)

    kernel = functools.partial(_affine_coupling_kernel, TH=TH, W=W)

    out_b_flat = pl.pallas_call(
        kernel,
        out_shape=jax.ShapeDtypeStruct((B, C2, HW), x_nchw.dtype),
        grid_spec=pltpu.PrefetchScalarGridSpec(
            num_scalar_prefetch=0,
            grid=(B, NR),
            in_specs=[
                pl.BlockSpec((1, 1, KCp, LOCALp), lambda b, r: (b, r, 0, 0)),
                pl.BlockSpec((1, C2, THW), lambda b, r: (b, 0, r)),
                pl.BlockSpec((F, KCp), lambda b, r: (0, 0)),
                pl.BlockSpec((F, 1), lambda b, r: (0, 0)),
                pl.BlockSpec((F, F), lambda b, r: (0, 0)),
                pl.BlockSpec((F, 1), lambda b, r: (0, 0)),
                pl.BlockSpec((9, C2, F), lambda b, r: (0, 0, 0)),
                pl.BlockSpec((9, 1, THW), lambda b, r: (0, 0, r)),
                pl.BlockSpec((C2, THW), lambda b, r: (0, r)),
            ],
            out_specs=pl.BlockSpec((1, C2, THW), lambda b, r: (b, 0, r)),
        ),
        compiler_params=pltpu.CompilerParams(
            dimension_semantics=("parallel", "parallel"),
            vmem_limit_bytes=vmem_limit),
        cost_estimate=pl.CostEstimate(flops=flops, transcendentals=0,
                                      bytes_accessed=bytes_accessed),
    )(xa_tiles, x_b_flat, w1t, b1c, w2t, b2c, w3t, tap_mask, addt)

    out_b = out_b_flat.reshape(B, C2, H, W)
    out = jnp.concatenate([x_nchw[:, :C2], out_b], axis=1)
    logdet = 0
    return out, logdet


def init_params(key, in_channel, filter_size):
    """Matches the PyTorch __init__: conv1/conv2 weights ~ N(0, 0.05),
    biases 0; ZeroConv2d weight / bias / scale = 0."""
    c2 = in_channel // 2
    k1, k2 = jax.random.split(key, 2)
    w1 = 0.05 * jax.random.normal(k1, (3, 3, c2, filter_size), jnp.float32)
    b1 = jnp.zeros((filter_size,), jnp.float32)
    w2 = 0.05 * jax.random.normal(k2, (filter_size, filter_size), jnp.float32)
    b2 = jnp.zeros((filter_size,), jnp.float32)
    w3 = jnp.zeros((3, 3, filter_size, c2), jnp.float32)
    b3 = jnp.zeros((c2,), jnp.float32)
    scale = jnp.zeros((c2,), jnp.float32)
    return (w1, b1, w2, b2, w3, b3, scale)


def reference_forward(x_nchw, params):
    """Pure-JAX reference mirroring the PyTorch forward (fp32 HIGHEST)."""
    w1, b1, w2, b2, w3, b3, scale = params
    B, C, H, W = x_nchw.shape
    C2 = C // 2
    x_a = x_nchw[:, :C2]
    x_b = x_nchw[:, C2:]
    xa = jnp.transpose(x_a, (0, 2, 3, 1)).astype(jnp.float32)

    dn1 = lax.conv_dimension_numbers(xa.shape, w1.shape, ('NHWC', 'HWIO', 'NHWC'))
    h = lax.conv_general_dilated(xa, w1, (1, 1), 'SAME', dimension_numbers=dn1,
                                 precision=lax.Precision.HIGHEST)
    h = jnp.maximum(h + b1.reshape(1, 1, 1, -1), 0.0)
    h = jnp.einsum('bhwi,io->bhwo', h, w2, precision=lax.Precision.HIGHEST)
    h = jnp.maximum(h + b2.reshape(1, 1, 1, -1), 0.0)
    hp = jnp.pad(h, ((0, 0), (1, 1), (1, 1), (0, 0)), constant_values=1.0)
    dn3 = lax.conv_dimension_numbers(hp.shape, w3.shape, ('NHWC', 'HWIO', 'NHWC'))
    h = lax.conv_general_dilated(hp, w3, (1, 1), 'VALID', dimension_numbers=dn3,
                                 precision=lax.Precision.HIGHEST)
    h = (h + b3.reshape(1, 1, 1, -1)) * jnp.exp(scale.reshape(1, 1, 1, -1) * 3.0)
    out_b = x_b.astype(jnp.float32) + jnp.transpose(h, (0, 3, 1, 2))
    return jnp.concatenate([x_a.astype(jnp.float32), out_b], axis=1), 0


if __name__ == "__main__":
    B, C, H, W = 2, 4, 16, 16      # small shapes; in_channel=4 -> C/2 = 2
    FILTER = 32                    # small stand-in for filter_size=512

    key = jax.random.PRNGKey(0)
    kx, kp, kr = jax.random.split(key, 3)
    x = jax.random.normal(kx, (B, C, H, W), jnp.float32)

    # --- faithful __init__ (ZeroConv2d weights zero -> net_out == 0) ---------
    params = init_params(kp, C, FILTER)
    out, logdet = affine_coupling_forward(x, params)
    out = jax.block_until_ready(out)
    ref, _ = reference_forward(x, params)
    assert out.shape == (B, C, H, W)
    assert jnp.allclose(out, ref, atol=1e-5, rtol=1e-5)
    # with zero-initialized ZeroConv2d, output must equal the input exactly
    assert jnp.allclose(out, x, atol=1e-6)

    # --- randomized weights: exercises the full conv/matmul path -------------
    kk = jax.random.split(kr, 5)
    rand_params = (
        0.05 * jax.random.normal(kk[0], (3, 3, C // 2, FILTER), jnp.float32),
        0.10 * jax.random.normal(kk[1], (FILTER,), jnp.float32),
        0.05 * jax.random.normal(kk[2], (FILTER, FILTER), jnp.float32),
        0.10 * jax.random.normal(kk[3], (FILTER,), jnp.float32),
        0.05 * jax.random.normal(kk[4], (3, 3, FILTER, C // 2), jnp.float32),
        0.10 * jnp.ones((C // 2,), jnp.float32),
        0.10 * jnp.ones((C // 2,), jnp.float32),
    )
    out2, _ = affine_coupling_forward(x, rand_params)
    out2 = jax.block_until_ready(out2)
    ref2, _ = reference_forward(x, rand_params)
    assert jnp.allclose(out2, ref2, atol=1e-2, rtol=1e-2)

    print("KERNEL_OK")
</pallas_src>

<mosaic_0001>
module attributes {stable_mosaic.version = 11 : i64} {
  func.func @_affine_coupling_kernel(%arg0: i32, %arg1: i32, %arg2: memref<1x1x24x384xbf16, #tpu.memory_space<vmem>>, %arg3: memref<1x2x256xf32, #tpu.memory_space<vmem>>, %arg4: memref<32x24xbf16, #tpu.memory_space<vmem>>, %arg5: memref<32x1xf32, #tpu.memory_space<vmem>>, %arg6: memref<32x32xbf16, #tpu.memory_space<vmem>>, %arg7: memref<32x1xf32, #tpu.memory_space<vmem>>, %arg8: memref<9x2x32xbf16, #tpu.memory_space<vmem>>, %arg9: memref<9x1x256xbf16, #tpu.memory_space<vmem>>, %arg10: memref<2x256xf32, #tpu.memory_space<vmem>>, %arg11: memref<1x2x256xf32, #tpu.memory_space<vmem>>) attributes {dimension_semantics = [#tpu.dimension_semantics<parallel>, #tpu.dimension_semantics<parallel>], iteration_bounds = array<i64: 2, 1>, scalar_prefetch = 0 : i64, scratch_operands = 0 : i64, tpu.core_type = #tpu.core_type<tc>, window_params = [{transform_indices = @transform_0, window_bounds = array<i64: 1, 1, 24, 384>}, {transform_indices = @transform_1, window_bounds = array<i64: 1, 2, 256>}, {pipeline_mode = #tpu.pipeline_mode<synchronous>, transform_indices = @transform_2, window_bounds = array<i64: 32, 24>}, {pipeline_mode = #tpu.pipeline_mode<synchronous>, transform_indices = @transform_3, window_bounds = array<i64: 32, 1>}, {pipeline_mode = #tpu.pipeline_mode<synchronous>, transform_indices = @transform_4, window_bounds = array<i64: 32, 32>}, {pipeline_mode = #tpu.pipeline_mode<synchronous>, transform_indices = @transform_5, window_bounds = array<i64: 32, 1>}, {pipeline_mode = #tpu.pipeline_mode<synchronous>, transform_indices = @transform_6, window_bounds = array<i64: 9, 2, 32>}, {transform_indices = @transform_7, window_bounds = array<i64: 9, 1, 256>}, {transform_indices = @transform_8, window_bounds = array<i64: 2, 256>}, {transform_indices = @transform_9, window_bounds = array<i64: 1, 2, 256>}]} {
    %c0 = arith.constant 0 : index
    %c0_0 = arith.constant 0 : index
    %c0_1 = arith.constant 0 : index
    %c0_2 = arith.constant 0 : index
    %0 = vector.load %arg2[%c0, %c0_0, %c0_1, %c0_2] : memref<1x1x24x384xbf16, #tpu.memory_space<vmem>>, vector<1x1x24x384xbf16>
    %1 = vector.shape_cast %0 : vector<1x1x24x384xbf16> to vector<24x384xbf16>
    %c0_3 = arith.constant 0 : index
    %c0_4 = arith.constant 0 : index
    %2 = vector.load %arg4[%c0_3, %c0_4] : memref<32x24xbf16, #tpu.memory_space<vmem>>, vector<32x24xbf16>
    %cst = arith.constant dense<0.000000e+00> : vector<32x384xf32>
    %3 = tpu.matmul %2, %1, %cst {dimension_numbers = #tpu.dot_dimension_numbers<[1], [0], [0], [1], [0, 0, 1, 1], [], []>} : vector<32x24xbf16>, vector<24x384xbf16>, vector<32x384xf32> -> vector<32x384xf32>
    %c0_5 = arith.constant 0 : index
    %c0_6 = arith.constant 0 : index
    %4 = vector.load %arg5[%c0_5, %c0_6] : memref<32x1xf32, #tpu.memory_space<vmem>>, vector<32x1xf32>
    %5 = vector.broadcast %4 : vector<32x1xf32> to vector<32x384xf32>
    %6 = arith.addf %3, %5 : vector<32x384xf32>
    %cst_7 = arith.constant 0.000000e+00 : f32
    %7 = vector.broadcast %cst_7 : f32 to vector<32x384xf32>
    %8 = arith.maximumf %6, %7 : vector<32x384xf32>
    %9 = arith.truncf %8 : vector<32x384xf32> to vector<32x384xbf16>
    %c0_8 = arith.constant 0 : index
    %c0_9 = arith.constant 0 : index
    %10 = vector.load %arg6[%c0_8, %c0_9] : memref<32x32xbf16, #tpu.memory_space<vmem>>, vector<32x32xbf16>
    %cst_10 = arith.constant dense<0.000000e+00> : vector<32x384xf32>
    %11 = tpu.matmul %10, %9, %cst_10 {dimension_numbers = #tpu.dot_dimension_numbers<[1], [0], [0], [1], [0, 0, 1, 1], [], []>} : vector<32x32xbf16>, vector<32x384xbf16>, vector<32x384xf32> -> vector<32x384xf32>
    %c0_11 = arith.constant 0 : index
    %c0_12 = arith.constant 0 : index
    %12 = vector.load %arg7[%c0_11, %c0_12] : memref<32x1xf32, #tpu.memory_space<vmem>>, vector<32x1xf32>
    %13 = vector.broadcast %12 : vector<32x1xf32> to vector<32x384xf32>
    %14 = arith.addf %11, %13 : vector<32x384xf32>
    %cst_13 = arith.constant 0.000000e+00 : f32
    %15 = vector.broadcast %cst_13 : f32 to vector<32x384xf32>
    %16 = arith.maximumf %14, %15 : vector<32x384xf32>
    %17 = arith.truncf %16 : vector<32x384xf32> to vector<32x384xbf16>
    %c0_14 = arith.constant 0 : index
    %c0_15 = arith.constant 0 : index
    %18 = vector.load %arg10[%c0_14, %c0_15] : memref<2x256xf32, #tpu.memory_space<vmem>>, vector<2x256xf32>
    %19 = vector.extract_strided_slice %17 {offsets = [0, 0], sizes = [32, 256], strides = [1, 1]} : vector<32x384xbf16> to vector<32x256xbf16>
    %c0_16 = arith.constant 0 : index
    %c0_17 = arith.constant 0 : index
    %c0_18 = arith.constant 0 : index
    %20 = vector.load %arg9[%c0_16, %c0_17, %c0_18] : memref<9x1x256xbf16, #tpu.memory_space<vmem>>, vector<1x1x256xbf16>
    %21 = vector.shape_cast %20 : vector<1x1x256xbf16> to vector<1x256xbf16>
    %22 = vector.broadcast %21 : vector<1x256xbf16> to vector<32x256xbf16>
    %23 = arith.mulf %19, %22 : vector<32x256xbf16>
    %c0_19 = arith.constant 0 : index
    %c0_20 = arith.constant 0 : index
    %c0_21 = arith.constant 0 : index
    %24 = vector.load %arg8[%c0_19, %c0_20, %c0_21] : memref<9x2x32xbf16, #tpu.memory_space<vmem>>, vector<1x2x32xbf16>
    %25 = vector.shape_cast %24 : vector<1x2x32xbf16> to vector<2x32xbf16>
    %cst_22 = arith.constant dense<0.000000e+00> : vector<2x256xf32>
    %26 = tpu.matmul %25, %23, %cst_22 {dimension_numbers = #tpu.dot_dimension_numbers<[1], [0], [0], [1], [0, 0, 1, 1], [], []>} : vector<2x32xbf16>, vector<32x256xbf16>, vector<2x256xf32> -> vector<2x256xf32>
    %27 = arith.addf %18, %26 : vector<2x256xf32>
    %28 = vector.extract_strided_slice %17 {offsets = [0, 1], sizes = [32, 256], strides = [1, 1]} : vector<32x384xbf16> to vector<32x256xbf16>
    %c1 = arith.constant 1 : index
    %c0_23 = arith.constant 0 : index
    %c0_24 = arith.constant 0 : index
    %29 = vector.load %arg9[%c1, %c0_23, %c0_24] : memref<9x1x256xbf16, #tpu.memory_space<vmem>>, vector<1x1x256xbf16>
    %30 = vector.shape_cast %29 : vector<1x1x256xbf16> to vector<1x256xbf16>
    %31 = vector.broadcast %30 : vector<1x256xbf16> to vector<32x256xbf16>
    %32 = arith.mulf %28, %31 : vector<32x256xbf16>
    %c1_25 = arith.constant 1 : index
    %c0_26 = arith.constant 0 : index
    %c0_27 = arith.constant 0 : index
    %33 = vector.load %arg8[%c1_25, %c0_26, %c0_27] : memref<9x2x32xbf16, #tpu.memory_space<vmem>>, vector<1x2x32xbf16>
    %34 = vector.shape_cast %33 : vector<1x2x32xbf16> to vector<2x32xbf16>
    %cst_28 = arith.constant dense<0.000000e+00> : vector<2x256xf32>
    %35 = tpu.matmul %34, %32, %cst_28 {dimension_numbers = #tpu.dot_dimension_numbers<[1], [0], [0], [1], [0, 0, 1, 1], [], []>} : vector<2x32xbf16>, vector<32x256xbf16>, vector<2x256xf32> -> vector<2x256xf32>
    %36 = arith.addf %27, %35 : vector<2x256xf32>
    %37 = vector.extract_strided_slice %17 {offsets = [0, 2], sizes = [32, 256], strides = [1, 1]} : vector<32x384xbf16> to vector<32x256xbf16>
    %c2 = arith.constant 2 : index
    %c0_29 = arith.constant 0 : index
    %c0_30 = arith.constant 0 : index
    %38 = vector.load %arg9[%c2, %c0_29, %c0_30] : memref<9x1x256xbf16, #tpu.memory_space<vmem>>, vector<1x1x256xbf16>
    %39 = vector.shape_cast %38 : vector<1x1x256xbf16> to vector<1x256xbf16>
    %40 = vector.broadcast %39 : vector<1x256xbf16> to vector<32x256xbf16>
    %41 = arith.mulf %37, %40 : vector<32x256xbf16>
    %c2_31 = arith.constant 2 : index
    %c0_32 = arith.constant 0 : index
    %c0_33 = arith.constant 0 : index
    %42 = vector.load %arg8[%c2_31, %c0_32, %c0_33] : memref<9x2x32xbf16, #tpu.memory_space<vmem>>, vector<1x2x32xbf16>
    %43 = vector.shape_cast %42 : vector<1x2x32xbf16> to vector<2x32xbf16>
    %cst_34 = arith.constant dense<0.000000e+00> : vector<2x256xf32>
    %44 = tpu.matmul %43, %41, %cst_34 {dimension_numbers = #tpu.dot_dimension_numbers<[1], [0], [0], [1], [0, 0, 1, 1], [], []>} : vector<2x32xbf16>, vector<32x256xbf16>, vector<2x256xf32> -> vector<2x256xf32>
    %45 = arith.addf %36, %44 : vector<2x256xf32>
    %46 = vector.extract_strided_slice %17 {offsets = [0, 16], sizes = [32, 256], strides = [1, 1]} : vector<32x384xbf16> to vector<32x256xbf16>
    %c3 = arith.constant 3 : index
    %c0_35 = arith.constant 0 : index
    %c0_36 = arith.constant 0 : index
    %47 = vector.load %arg9[%c3, %c0_35, %c0_36] : memref<9x1x256xbf16, #tpu.memory_space<vmem>>, vector<1x1x256xbf16>
    %48 = vector.shape_cast %47 : vector<1x1x256xbf16> to vector<1x256xbf16>
    %49 = vector.broadcast %48 : vector<1x256xbf16> to vector<32x256xbf16>
    %50 = arith.mulf %46, %49 : vector<32x256xbf16>
    %c3_37 = arith.constant 3 : index
    %c0_38 = arith.constant 0 : index
    %c0_39 = arith.constant 0 : index
    %51 = vector.load %arg8[%c3_37, %c0_38, %c0_39] : memref<9x2x32xbf16, #tpu.memory_space<vmem>>, vector<1x2x32xbf16>
    %52 = vector.shape_cast %51 : vector<1x2x32xbf16> to vector<2x32xbf16>
    %cst_40 = arith.constant dense<0.000000e+00> : vector<2x256xf32>
    %53 = tpu.matmul %52, %50, %cst_40 {dimension_numbers = #tpu.dot_dimension_numbers<[1], [0], [0], [1], [0, 0, 1, 1], [], []>} : vector<2x32xbf16>, vector<32x256xbf16>, vector<2x256xf32> -> vector<2x256xf32>
    %54 = arith.addf %45, %53 : vector<2x256xf32>
    %55 = vector.extract_strided_slice %17 {offsets = [0, 17], sizes = [32, 256], strides = [1, 1]} : vector<32x384xbf16> to vector<32x256xbf16>
    %c4 = arith.constant 4 : index
    %c0_41 = arith.constant 0 : index
    %c0_42 = arith.constant 0 : index
    %56 = vector.load %arg9[%c4, %c0_41, %c0_42] : memref<9x1x256xbf16, #tpu.memory_space<vmem>>, vector<1x1x256xbf16>
    %57 = vector.shape_cast %56 : vector<1x1x256xbf16> to vector<1x256xbf16>
    %58 = vector.broadcast %57 : vector<1x256xbf16> to vector<32x256xbf16>
    %59 = arith.mulf %55, %58 : vector<32x256xbf16>
    %c4_43 = arith.constant 4 : index
    %c0_44 = arith.constant 0 : index
    %c0_45 = arith.constant 0 : index
    %60 = vector.load %arg8[%c4_43, %c0_44, %c0_45] : memref<9x2x32xbf16, #tpu.memory_space<vmem>>, vector<1x2x32xbf16>
    %61 = vector.shape_cast %60 : vector<1x2x32xbf16> to vector<2x32xbf16>
    %cst_46 = arith.constant dense<0.000000e+00> : vector<2x256xf32>
    %62 = tpu.matmul %61, %59, %cst_46 {dimension_numbers = #tpu.dot_dimension_numbers<[1], [0], [0], [1], [0, 0, 1, 1], [], []>} : vector<2x32xbf16>, vector<32x256xbf16>, vector<2x256xf32> -> vector<2x256xf32>
    %63 = arith.addf %54, %62 : vector<2x256xf32>
    %64 = vector.extract_strided_slice %17 {offsets = [0, 18], sizes = [32, 256], strides = [1, 1]} : vector<32x384xbf16> to vector<32x256xbf16>
    %c5 = arith.constant 5 : index
    %c0_47 = arith.constant 0 : index
    %c0_48 = arith.constant 0 : index
    %65 = vector.load %arg9[%c5, %c0_47, %c0_48] : memref<9x1x256xbf16, #tpu.memory_space<vmem>>, vector<1x1x256xbf16>
    %66 = vector.shape_cast %65 : vector<1x1x256xbf16> to vector<1x256xbf16>
    %67 = vector.broadcast %66 : vector<1x256xbf16> to vector<32x256xbf16>
    %68 = arith.mulf %64, %67 : vector<32x256xbf16>
    %c5_49 = arith.constant 5 : index
    %c0_50 = arith.constant 0 : index
    %c0_51 = arith.constant 0 : index
    %69 = vector.load %arg8[%c5_49, %c0_50, %c0_51] : memref<9x2x32xbf16, #tpu.memory_space<vmem>>, vector<1x2x32xbf16>
    %70 = vector.shape_cast %69 : vector<1x2x32xbf16> to vector<2x32xbf16>
    %cst_52 = arith.constant dense<0.000000e+00> : vector<2x256xf32>
    %71 = tpu.matmul %70, %68, %cst_52 {dimension_numbers = #tpu.dot_dimension_numbers<[1], [0], [0], [1], [0, 0, 1, 1], [], []>} : vector<2x32xbf16>, vector<32x256xbf16>, vector<2x256xf32> -> vector<2x256xf32>
    %72 = arith.addf %63, %71 : vector<2x256xf32>
    %73 = vector.extract_strided_slice %17 {offsets = [0, 32], sizes = [32, 256], strides = [1, 1]} : vector<32x384xbf16> to vector<32x256xbf16>
    %c6 = arith.constant 6 : index
    %c0_53 = arith.constant 0 : index
    %c0_54 = arith.constant 0 : index
    %74 = vector.load %arg9[%c6, %c0_53, %c0_54] : memref<9x1x256xbf16, #tpu.memory_space<vmem>>, vector<1x1x256xbf16>
    %75 = vector.shape_cast %74 : vector<1x1x256xbf16> to vector<1x256xbf16>
    %76 = vector.broadcast %75 : vector<1x256xbf16> to vector<32x256xbf16>
    %77 = arith.mulf %73, %76 : vector<32x256xbf16>
    %c6_55 = arith.constant 6 : index
    %c0_56 = arith.constant 0 : index
    %c0_57 = arith.constant 0 : index
    %78 = vector.load %arg8[%c6_55, %c0_56, %c0_57] : memref<9x2x32xbf16, #tpu.memory_space<vmem>>, vector<1x2x32xbf16>
    %79 = vector.shape_cast %78 : vector<1x2x32xbf16> to vector<2x32xbf16>
    %cst_58 = arith.constant dense<0.000000e+00> : vector<2x256xf32>
    %80 = tpu.matmul %79, %77, %cst_58 {dimension_numbers = #tpu.dot_dimension_numbers<[1], [0], [0], [1], [0, 0, 1, 1], [], []>} : vector<2x32xbf16>, vector<32x256xbf16>, vector<2x256xf32> -> vector<2x256xf32>
    %81 = arith.addf %72, %80 : vector<2x256xf32>
    %82 = vector.extract_strided_slice %17 {offsets = [0, 33], sizes = [32, 256], strides = [1, 1]} : vector<32x384xbf16> to vector<32x256xbf16>
    %c7 = arith.constant 7 : index
    %c0_59 = arith.constant 0 : index
    %c0_60 = arith.constant 0 : index
    %83 = vector.load %arg9[%c7, %c0_59, %c0_60] : memref<9x1x256xbf16, #tpu.memory_space<vmem>>, vector<1x1x256xbf16>
    %84 = vector.shape_cast %83 : vector<1x1x256xbf16> to vector<1x256xbf16>
    %85 = vector.broadcast %84 : vector<1x256xbf16> to vector<32x256xbf16>
    %86 = arith.mulf %82, %85 : vector<32x256xbf16>
    %c7_61 = arith.constant 7 : index
    %c0_62 = arith.constant 0 : index
    %c0_63 = arith.constant 0 : index
    %87 = vector.load %arg8[%c7_61, %c0_62, %c0_63] : memref<9x2x32xbf16, #tpu.memory_space<vmem>>, vector<1x2x32xbf16>
    %88 = vector.shape_cast %87 : vector<1x2x32xbf16> to vector<2x32xbf16>
    %cst_64 = arith.constant dense<0.000000e+00> : vector<2x256xf32>
    %89 = tpu.matmul %88, %86, %cst_64 {dimension_numbers = #tpu.dot_dimension_numbers<[1], [0], [0], [1], [0, 0, 1, 1], [], []>} : vector<2x32xbf16>, vector<32x256xbf16>, vector<2x256xf32> -> vector<2x256xf32>
    %90 = arith.addf %81, %89 : vector<2x256xf32>
    %91 = vector.extract_strided_slice %17 {offsets = [0, 34], sizes = [32, 256], strides = [1, 1]} : vector<32x384xbf16> to vector<32x256xbf16>
    %c8 = arith.constant 8 : index
    %c0_65 = arith.constant 0 : index
    %c0_66 = arith.constant 0 : index
    %92 = vector.load %arg9[%c8, %c0_65, %c0_66] : memref<9x1x256xbf16, #tpu.memory_space<vmem>>, vector<1x1x256xbf16>
    %93 = vector.shape_cast %92 : vector<1x1x256xbf16> to vector<1x256xbf16>
    %94 = vector.broadcast %93 : vector<1x256xbf16> to vector<32x256xbf16>
    %95 = arith.mulf %91, %94 : vector<32x256xbf16>
    %c8_67 = arith.constant 8 : index
    %c0_68 = arith.constant 0 : index
    %c0_69 = arith.constant 0 : index
    %96 = vector.load %arg8[%c8_67, %c0_68, %c0_69] : memref<9x2x32xbf16, #tpu.memory_space<vmem>>, vector<1x2x32xbf16>
    %97 = vector.shape_cast %96 : vector<1x2x32xbf16> to vector<2x32xbf16>
    %cst_70 = arith.constant dense<0.000000e+00> : vector<2x256xf32>
    %98 = tpu.matmul %97, %95, %cst_70 {dimension_numbers = #tpu.dot_dimension_numbers<[1], [0], [0], [1], [0, 0, 1, 1], [], []>} : vector<2x32xbf16>, vector<32x256xbf16>, vector<2x256xf32> -> vector<2x256xf32>
    %99 = arith.addf %90, %98 : vector<2x256xf32>
    %c0_71 = arith.constant 0 : index
    %c0_72 = arith.constant 0 : index
    %c0_73 = arith.constant 0 : index
    %100 = vector.load %arg3[%c0_71, %c0_72, %c0_73] : memref<1x2x256xf32, #tpu.memory_space<vmem>>, vector<1x2x256xf32>
    %101 = vector.shape_cast %100 : vector<1x2x256xf32> to vector<2x256xf32>
    %102 = arith.addf %101, %99 : vector<2x256xf32>
    %c0_74 = arith.constant 0 : index
    %c0_75 = arith.constant 0 : index
    %c0_76 = arith.constant 0 : index
    %103 = vector.load %arg11[%c0_74, %c0_75, %c0_76] : memref<1x2x256xf32, #tpu.memory_space<vmem>>, vector<1x2x256xf32>
    %104 = vector.shape_cast %103 : vector<1x2x256xf32> to vector<2x256xf32>
    %105 = vector.shape_cast %102 : vector<2x256xf32> to vector<1x2x256xf32>
    tpu.vector_store %arg11[%c0_74, %c0_75, %c0_76], %105 {strides = array<i32>} : memref<1x2x256xf32, #tpu.memory_space<vmem>>, vector<1x2x256xf32>,
    return
  }
  func.func @transform_0(%arg0: i32, %arg1: i32) -> (i32, i32, i32, i32) {
    %c0_i32 = arith.constant 0 : i32
    %c0_i32_0 = arith.constant 0 : i32
    %c0_i32_1 = arith.constant 0 : i32
    return %arg0, %arg1, %c0_i32, %c0_i32_0 : i32, i32, i32, i32
  }
  func.func @transform_1(%arg0: i32, %arg1: i32) -> (i32, i32, i32) {
    %c0_i32 = arith.constant 0 : i32
    %c0_i32_0 = arith.constant 0 : i32
    return %arg0, %c0_i32, %arg1 : i32, i32, i32
  }
  func.func @transform_2(%arg0: i32, %arg1: i32) -> (i32, i32) {
    %c0_i32 = arith.constant 0 : i32
    %c0_i32_0 = arith.constant 0 : i32
    %c0_i32_1 = arith.constant 0 : i32
    return %c0_i32, %c0_i32_0 : i32, i32
  }
  func.func @transform_3(%arg0: i32, %arg1: i32) -> (i32, i32) {
    %c0_i32 = arith.constant 0 : i32
    %c0_i32_0 = arith.constant 0 : i32
    %c0_i32_1 = arith.constant 0 : i32
    return %c0_i32, %c0_i32_0 : i32, i32
  }
  func.func @transform_4(%arg0: i32, %arg1: i32) -> (i32, i32) {
    %c0_i32 = arith.constant 0 : i32
    %c0_i32_0 = arith.constant 0 : i32
    %c0_i32_1 = arith.constant 0 : i32
    return %c0_i32, %c0_i32_0 : i32, i32
  }
  func.func @transform_5(%arg0: i32, %arg1: i32) -> (i32, i32) {
    %c0_i32 = arith.constant 0 : i32
    %c0_i32_0 = arith.constant 0 : i32
    %c0_i32_1 = arith.constant 0 : i32
    return %c0_i32, %c0_i32_0 : i32, i32
  }
  func.func @transform_6(%arg0: i32, %arg1: i32) -> (i32, i32, i32) {
    %c0_i32 = arith.constant 0 : i32
    %c0_i32_0 = arith.constant 0 : i32
    %c0_i32_1 = arith.constant 0 : i32
    %c0_i32_2 = arith.constant 0 : i32
    return %c0_i32, %c0_i32_0, %c0_i32_1 : i32, i32, i32
  }
  func.func @transform_7(%arg0: i32, %arg1: i32) -> (i32, i32, i32) {
    %c0_i32 = arith.constant 0 : i32
    %c0_i32_0 = arith.constant 0 : i32
    %c0_i32_1 = arith.constant 0 : i32
    return %c0_i32, %c0_i32_0, %arg1 : i32, i32, i32
  }
  func.func @transform_8(%arg0: i32, %arg1: i32) -> (i32, i32) {
    %c0_i32 = arith.constant 0 : i32
    %c0_i32_0 = arith.constant 0 : i32
    return %c0_i32, %arg1 : i32, i32
  }
  func.func @transform_9(%arg0: i32, %arg1: i32) -> (i32, i32, i32) {
    %c0_i32 = arith.constant 0 : i32
    %c0_i32_0 = arith.constant 0 : i32
    return %arg0, %c0_i32, %arg1 : i32, i32, i32
  }
}

</mosaic_0001>

<llo_original>
// kernel: tpu_custom_call.1
$region0: #{tpu_custom_call.1}
  #allocation0 [shape = 'u32[]', space=smem, size = 0x4, offset = 0x4, fixed_abs, tag = 'smem constant byte address 0x4 - core index']
  #allocation1 [shape = 'u32[144,128]{1,0:T(1,128)}', space=vmem, size = 0x12000, scoped, tag = 'internal scratch']
  %s0 = inlined_call_operand.vmem [shape: bf16[2,1,24,384], index: 0, kind: input, shape index: {}]
  %s1 = inlined_call_operand.vmem [shape: f32[2,2,256], index: 1, kind: input, shape index: {}]
  %s2 = inlined_call_operand.vmem [shape: bf16[32,24], index: 2, kind: input, shape index: {}]
  %s3 = inlined_call_operand.vmem [shape: f32[32,1], index: 3, kind: input, shape index: {}]
  %s4 = inlined_call_operand.vmem [shape: bf16[32,32], index: 4, kind: input, shape index: {}]
  %s5 = inlined_call_operand.vmem [shape: f32[32,1], index: 5, kind: input, shape index: {}]
  %s6 = inlined_call_operand.vmem [shape: bf16[9,2,32], index: 6, kind: input, shape index: {}]
  %s7 = inlined_call_operand.vmem [shape: bf16[9,1,256], index: 7, kind: input, shape index: {}]
  %s8 = inlined_call_operand.vmem [shape: f32[2,256], index: 8, kind: input, shape index: {}]
  %s9 = inlined_call_operand.hbm [shape: f32[2,2,256], index: 9, kind: output, shape index: {}]
  %s10 = sld [smem:[#allocation0]]
  $region69: #{tpu_custom_call.1} parent=0
    _
  %s12 = ssub.s32 1, %s10
  %s13 = scalar_select 0, %s12, %s10
  $region1: #{tpu_custom_call.1} parent=0
    #allocation2 [shape = 'u8[4096]{0}', space=vmem, size = 0x1000, scoped, tag = 'output window, operand 0']
    #allocation3 [shape = 's32[2]{0}', space=sflag, size = 0x8, scoped, tag = 'scoped memory for tpu_custom_call.1']
    %14 = vsyncpa [#allocation3], 0
    %s15 = scalar_lea.sflag [#allocation3], 1
    %16 = vsyncpa %s15, 0
    loop: start=0, step=1, limit=4
    $region2: #{tpu_custom_call.1} parent=1 // loop_pre_header
      _
    $region3: #{tpu_custom_call.1} parent=1 // loop_header
      %s18 = sphi 0, %s22
      %p19 = scmp.ge.s32.totalorder %s18, 4
      %s25 = sphi 0, %s37
      %s26 = sphi 0, %s33
      %s27 = sphi 0, %s25
      %s28 = sphi 0, %s26
      %s29 = sphi 0, %s27
      %s30 = sphi 0, %s28
      %s42 = sphi 0, %s44
      %s45 = sphi 0, %s42
      %s46 = sphi 0, %s45
      %s62 = sphi 0, %s46
      %s70 = sphi 0, %s72
      %s73 = sphi 0, %s70
      %s74 = sphi 0, %s73
      %s90 = sphi 0, %s74
      %s94 = sphi 0, %s94
      %s96 = sphi 0, %s94
      %s97 = sphi 0, %s96
      %s111 = sphi 0, %s97
      %s115 = sphi 0, %s115
      %s117 = sphi 0, %s115
      %s118 = sphi 0, %s117
      %s132 = sphi 0, %s118
      %s136 = sphi 0, %s136
      %s138 = sphi 0, %s136
      %s139 = sphi 0, %s138
      %s153 = sphi 0, %s139
      %s157 = sphi 0, %s157
      %s159 = sphi 0, %s157
      %s160 = sphi 0, %s159
      %s174 = sphi 0, %s160
      %s178 = sphi 0, %s178
      %s180 = sphi 0, %s178
      %s181 = sphi 0, %s180
      %s195 = sphi 0, %s181
      %s201 = sphi 0, %s203
      %s204 = sphi 0, %s201
      %s205 = sphi 0, %s204
      %s221 = sphi 0, %s205
      %s227 = sphi 0, %s229
      %s230 = sphi 0, %s227
      %s231 = sphi 0, %s230
      %s247 = sphi 0, %s231
      %s255 = sphi 0, %s257
      %s258 = sphi 0, %s255
      %s259 = sphi 0, %s258
      %s275 = sphi 0, %s259
    $region4: #{tpu_custom_call.1} parent=1 // loop_header_branch
      %21 = sbr.rel (%p19) target = $region8
    $region5: #{tpu_custom_call.1} parent=1 // loop_body
      %s23 = ssub.s32 %s18, 1
      %s24 = ssub.s32 %s18, 2
      %s31 = sadd.s32 1, %s26
      %p32 = scmp.ge.s32.totalorder %s31, 1
      %s33 = scalar_select %p32, 0, %s31
      %s34 = sadd.s32 1, %s25
      %s35 = scalar_select %p32, %s34, %s25
      %p36 = scmp.ge.s32.totalorder %s35, 2
      %s37 = scalar_select %p36, 0, %s35
      %s38 = ssub.s32 %s25, %s37
      %s39 = ssub.s32 %s26, %s33
      %s40 = sor.u32 %s38, %s39
      %p41 = scmp.eq.s32.totalorder %s40, 0
      %s43 = sadd.s32 %s42, 1
      %s44 = scalar_select %p41, %s42, %s43
      %p47 = pneg %p41
      %p48 = scmp.eq.s32.totalorder %s18, 1
      %p49 = por %p47, %p48
      %p50 = scmp.ne.s32.totalorder %s42, %s45
      %p51 = scmp.eq.s32.totalorder %s18, 0
      %p52 = por %p50, %p51
      %p53 = scmp.ne.s32.totalorder %s42, %s45
      %p54 = scmp.eq.s32.totalorder %s23, 1
      %p55 = por %p53, %p54
      %p56 = scmp.ne.s32.totalorder %s45, %s46
      %p57 = scmp.eq.s32.totalorder %s23, 0
      %p58 = por %p56, %p57
      %p59 = scmp.ne.s32.totalorder %s45, %s46
      %p60 = scmp.eq.s32.totalorder %s24, 1
      %p61 = por %p59, %p60
      %p63 = scmp.ne.s32.totalorder %s46, %s62
      %p64 = scmp.eq.s32.totalorder %s24, 0
      %p65 = por %p63, %p64
      %s66 = ssub.s32 %s25, %s37
      %s67 = ssub.s32 %s26, %s33
      %s68 = sor.u32 %s66, %s67
      %p69 = scmp.eq.s32.totalorder %s68, 0
      %s71 = sadd.s32 %s70, 1
      %s72 = scalar_select %p69, %s70, %s71
      %p75 = pneg %p69
      %p76 = scmp.eq.s32.totalorder %s18, 1
      %p77 = por %p75, %p76
      %p78 = scmp.ne.s32.totalorder %s70, %s73
      %p79 = scmp.eq.s32.totalorder %s18, 0
      %p80 = por %p78, %p79
      %p81 = scmp.ne.s32.totalorder %s70, %s73
      %p82 = scmp.eq.s32.totalorder %s23, 1
      %p83 = por %p81, %p82
      %p84 = scmp.ne.s32.totalorder %s73, %s74
      %p85 = scmp.eq.s32.totalorder %s23, 0
      %p86 = por %p84, %p85
      %p87 = scmp.ne.s32.totalorder %s73, %s74
      %p88 = scmp.eq.s32.totalorder %s24, 1
      %p89 = por %p87, %p88
      %p91 = scmp.ne.s32.totalorder %s74, %s90
      %p92 = scmp.eq.s32.totalorder %s24, 0
      %p93 = por %p91, %p92
      %s95 = sadd.s32 %s94, 1
      %p98 = scmp.eq.s32.totalorder %s18, 1
      %p99 = scmp.ne.s32.totalorder %s94, %s96
      %p100 = scmp.eq.s32.totalorder %s18, 0
      %p101 = por %p99, %p100
      %p102 = scmp.ne.s32.totalorder %s94, %s96
      %p103 = scmp.eq.s32.totalorder %s23, 1
      %p104 = por %p102, %p103
      %p105 = scmp.ne.s32.totalorder %s96, %s97
      %p106 = scmp.eq.s32.totalorder %s23, 0
      %p107 = por %p105, %p106
      %p108 = scmp.ne.s32.totalorder %s96, %s97
      %p109 = scmp.eq.s32.totalorder %s24, 1
      %p110 = por %p108, %p109
      %p112 = scmp.ne.s32.totalorder %s97, %s111
      %p113 = scmp.eq.s32.totalorder %s24, 0
      %p114 = por %p112, %p113
      %s116 = sadd.s32 %s115, 1
      %p119 = scmp.eq.s32.totalorder %s18, 1
      %p120 = scmp.ne.s32.totalorder %s115, %s117
      %p121 = scmp.eq.s32.totalorder %s18, 0
      %p122 = por %p120, %p121
      %p123 = scmp.ne.s32.totalorder %s115, %s117
      %p124 = scmp.eq.s32.totalorder %s23, 1
      %p125 = por %p123, %p124
      %p126 = scmp.ne.s32.totalorder %s117, %s118
      %p127 = scmp.eq.s32.totalorder %s23, 0
      %p128 = por %p126, %p127
      %p129 = scmp.ne.s32.totalorder %s117, %s118
      %p130 = scmp.eq.s32.totalorder %s24, 1
      %p131 = por %p129, %p130
      %p133 = scmp.ne.s32.totalorder %s118, %s132
      %p134 = scmp.eq.s32.totalorder %s24, 0
      %p135 = por %p133, %p134
      %s137 = sadd.s32 %s136, 1
      %p140 = scmp.eq.s32.totalorder %s18, 1
      %p141 = scmp.ne.s32.totalorder %s136, %s138
      %p142 = scmp.eq.s32.totalorder %s18, 0
      %p143 = por %p141, %p142
      %p144 = scmp.ne.s32.totalorder %s136, %s138
      %p145 = scmp.eq.s32.totalorder %s23, 1
      %p146 = por %p144, %p145
      %p147 = scmp.ne.s32.totalorder %s138, %s139
      %p148 = scmp.eq.s32.totalorder %s23, 0
      %p149 = por %p147, %p148
      %p150 = scmp.ne.s32.totalorder %s138, %s139
      %p151 = scmp.eq.s32.totalorder %s24, 1
      %p152 = por %p150, %p151
      %p154 = scmp.ne.s32.totalorder %s139, %s153
      %p155 = scmp.eq.s32.totalorder %s24, 0
      %p156 = por %p154, %p155
      %s158 = sadd.s32 %s157, 1
      %p161 = scmp.eq.s32.totalorder %s18, 1
      %p162 = scmp.ne.s32.totalorder %s157, %s159
      %p163 = scmp.eq.s32.totalorder %s18, 0
      %p164 = por %p162, %p163
      %p165 = scmp.ne.s32.totalorder %s157, %s159
      %p166 = scmp.eq.s32.totalorder %s23, 1
      %p167 = por %p165, %p166
      %p168 = scmp.ne.s32.totalorder %s159, %s160
      %p169 = scmp.eq.s32.totalorder %s23, 0
      %p170 = por %p168, %p169
      %p171 = scmp.ne.s32.totalorder %s159, %s160
      %p172 = scmp.eq.s32.totalorder %s24, 1
      %p173 = por %p171, %p172
      %p175 = scmp.ne.s32.totalorder %s160, %s174
      %p176 = scmp.eq.s32.totalorder %s24, 0
      %p177 = por %p175, %p176
      %s179 = sadd.s32 %s178, 1
      %p182 = scmp.eq.s32.totalorder %s18, 1
      %p183 = scmp.ne.s32.totalorder %s178, %s180
      %p184 = scmp.eq.s32.totalorder %s18, 0
      %p185 = por %p183, %p184
      %p186 = scmp.ne.s32.totalorder %s178, %s180
      %p187 = scmp.eq.s32.totalorder %s23, 1
      %p188 = por %p186, %p187
      %p189 = scmp.ne.s32.totalorder %s180, %s181
      %p190 = scmp.eq.s32.totalorder %s23, 0
      %p191 = por %p189, %p190
      %p192 = scmp.ne.s32.totalorder %s180, %s181
      %p193 = scmp.eq.s32.totalorder %s24, 1
      %p194 = por %p192, %p193
      %p196 = scmp.ne.s32.totalorder %s181, %s195
      %p197 = scmp.eq.s32.totalorder %s24, 0
      %p198 = por %p196, %p197
      %s199 = ssub.s32 %s26, %s33
      %p200 = scmp.eq.s32.totalorder %s199, 0
      %s202 = sadd.s32 %s201, 1
      %s203 = scalar_select %p200, %s201, %s202
      %p206 = pneg %p200
      %p207 = scmp.eq.s32.totalorder %s18, 1
      %p208 = por %p206, %p207
      %p209 = scmp.ne.s32.totalorder %s201, %s204
      %p210 = scmp.eq.s32.totalorder %s18, 0
      %p211 = por %p209, %p210
      %p212 = scmp.ne.s32.totalorder %s201, %s204
      %p213 = scmp.eq.s32.totalorder %s23, 1
      %p214 = por %p212, %p213
      %p215 = scmp.ne.s32.totalorder %s204, %s205
      %p216 = scmp.eq.s32.totalorder %s23, 0
      %p217 = por %p215, %p216
      %p218 = scmp.ne.s32.totalorder %s204, %s205
      %p219 = scmp.eq.s32.totalorder %s24, 1
      %p220 = por %p218, %p219
      %p222 = scmp.ne.s32.totalorder %s205, %s221
      %p223 = scmp.eq.s32.totalorder %s24, 0
      %p224 = por %p222, %p223
      %s225 = ssub.s32 %s26, %s33
      %p226 = scmp.eq.s32.totalorder %s225, 0
      %s228 = sadd.s32 %s227, 1
      %s229 = scalar_select %p226, %s227, %s228
      %p232 = pneg %p226
      %p233 = scmp.eq.s32.totalorder %s18, 1
      %p234 = por %p232, %p233
      %p235 = scmp.ne.s32.totalorder %s227, %s230
      %p236 = scmp.eq.s32.totalorder %s18, 0
      %p237 = por %p235, %p236
      %p238 = scmp.ne.s32.totalorder %s227, %s230
      %p239 = scmp.eq.s32.totalorder %s23, 1
      %p240 = por %p238, %p239
      %p241 = scmp.ne.s32.totalorder %s230, %s231
      %p242 = scmp.eq.s32.totalorder %s23, 0
      %p243 = por %p241, %p242
      %p244 = scmp.ne.s32.totalorder %s230, %s231
      %p245 = scmp.eq.s32.totalorder %s24, 1
      %p246 = por %p244, %p245
      %p248 = scmp.ne.s32.totalorder %s231, %s247
      %p249 = scmp.eq.s32.totalorder %s24, 0
      %p250 = por %p248, %p249
      %s251 = ssub.s32 %s25, %s37
      %s252 = ssub.s32 %s26, %s33
      %s253 = sor.u32 %s251, %s252
      %p254 = scmp.eq.s32.totalorder %s253, 0
      %s256 = sadd.s32 %s255, 1
      %s257 = scalar_select %p254, %s255, %s256
      %p260 = pneg %p254
      %p261 = scmp.eq.s32.totalorder %s18, 1
      %p262 = por %p260, %p261
      %p263 = scmp.ne.s32.totalorder %s255, %s258
      %p264 = scmp.eq.s32.totalorder %s18, 0
      %p265 = por %p263, %p264
      %p266 = scmp.ne.s32.totalorder %s255, %s258
      %p267 = scmp.eq.s32.totalorder %s23, 1
      %p268 = por %p266, %p267
      %p269 = scmp.ne.s32.totalorder %s258, %s259
      %p270 = scmp.eq.s32.totalorder %s23, 0
      %p271 = por %p269, %p270
      %p272 = scmp.ne.s32.totalorder %s258, %s259
      %p273 = scmp.eq.s32.totalorder %s24, 1
      %p274 = por %p272, %p273
      %p276 = scmp.ne.s32.totalorder %s259, %s275
      %p277 = scmp.eq.s32.totalorder %s24, 0
      %p278 = por %p276, %p277
      %p279 = scmp.le.s32.totalorder 1, %s18
      %p280 = scmp.lt.s32.totalorder %s18, 3
      %p281 = pnand %p279, %p280
      %p282 = pneg %p281
      // Predicated region
      $region9: #{tpu_custom_call.1} parent=5 // pred_check
        _
      $region10: #{tpu_custom_call.1} parent=5 // pred_check_branch
        %284 = sbr.rel (%p281) target = $region12
      $region11: #{tpu_custom_call.1} parent=5 // pred_region
        %s285 = ssub.s32 %s18, 1
        // Predicated region
        $region13: #{tpu_custom_call.1} parent=11 // pred_check
          %p286 = pneg %p107
        $region14: #{tpu_custom_call.1} parent=11 // pred_check_branch
          %288 = sbr.rel (%p286) target = $region16
        $region15: #{tpu_custom_call.1} parent=11 // pred_region
          _
        $region16: #{tpu_custom_call.1} parent=11 // pred_fallthru
          _
        // Predicated region
        $region17: #{tpu_custom_call.1} parent=11 // pred_check
          %p289 = pneg %p128
        $region18: #{tpu_custom_call.1} parent=11 // pred_check_branch
          %291 = sbr.rel (%p289) target = $region20
        $region19: #{tpu_custom_call.1} parent=11 // pred_region
          _
        $region20: #{tpu_custom_call.1} parent=11 // pred_fallthru
          _
        // Predicated region
        $region21: #{tpu_custom_call.1} parent=11 // pred_check
          %p292 = pneg %p149
        $region22: #{tpu_custom_call.1} parent=11 // pred_check_branch
          %294 = sbr.rel (%p292) target = $region24
        $region23: #{tpu_custom_call.1} parent=11 // pred_region
          _
        $region24: #{tpu_custom_call.1} parent=11 // pred_fallthru
          _
        // Predicated region
        $region25: #{tpu_custom_call.1} parent=11 // pred_check
          %p295 = pneg %p170
        $region26: #{tpu_custom_call.1} parent=11 // pred_check_branch
          %297 = sbr.rel (%p295) target = $region28
        $region27: #{tpu_custom_call.1} parent=11 // pred_region
          _
        $region28: #{tpu_custom_call.1} parent=11 // pred_fallthru
          _
        // Predicated region
        $region29: #{tpu_custom_call.1} parent=11 // pred_check
          %p298 = pneg %p191
        $region30: #{tpu_custom_call.1} parent=11 // pred_check_branch
          %300 = sbr.rel (%p298) target = $region32
        $region31: #{tpu_custom_call.1} parent=11 // pred_region
          _
        $region32: #{tpu_custom_call.1} parent=11 // pred_fallthru
          _
        // Predicated region
        $region33: #{tpu_custom_call.1} parent=11 // pred_check
          %p301 = pneg %p217
        $region34: #{tpu_custom_call.1} parent=11 // pred_check_branch
          %303 = sbr.rel (%p301) target = $region36
        $region35: #{tpu_custom_call.1} parent=11 // pred_region
          %s304 = smul.u32 2, %s28
          %p305 = scmp.lt.s32.totalorder %s304, 1
          %s306 = scalar_select %p305, %s304, 1
          %s307 = scalar_lea.vmem %s7, %s306
          %s308 = smul.u32 2, %s28
        $region36: #{tpu_custom_call.1} parent=11 // pred_fallthru
          _
        // Predicated region
        $region37: #{tpu_custom_call.1} parent=11 // pred_check
          %p309 = pneg %p243
        $region38: #{tpu_custom_call.1} parent=11 // pred_check_branch
          %311 = sbr.rel (%p309) target = $region40
        $region39: #{tpu_custom_call.1} parent=11 // pred_region
          %s312 = smul.u32 2, %s28
          %p313 = scmp.lt.s32.totalorder %s312, 1
          %s314 = scalar_select %p313, %s312, 1
          %s315 = smul.addr %s314, 2
          %s316 = scalar_lea.vmem %s8, %s315
          %s317 = smul.u32 2, %s28
        $region40: #{tpu_custom_call.1} parent=11 // pred_fallthru
          _
      $region12: #{tpu_custom_call.1} parent=5 // pred_fallthru
        _
      %p318 = scmp.lt.s32.totalorder %s18, 2
      // Predicated region
      $region41: #{tpu_custom_call.1} parent=5 // pred_check
        %p319 = pneg %p318
      $region42: #{tpu_custom_call.1} parent=5 // pred_check_branch
        %321 = sbr.rel (%p319) target = $region44
      $region43: #{tpu_custom_call.1} parent=5 // pred_region
        // Predicated region
        $region45: #{tpu_custom_call.1} parent=43 // pred_check
          %p322 = pneg %p52
        $region46: #{tpu_custom_call.1} parent=43 // pred_check_branch
          %324 = sbr.rel (%p322) target = $region48
        $region47: #{tpu_custom_call.1} parent=43 // pred_region
          %p325 = scmp.lt.s32.totalorder %s25, 1
          %s326 = scalar_select %p325, %s25, 1
          %p327 = scmp.lt.s32.totalorder %s26, 0
          %s328 = scalar_select %p327, %s26, 0
          %s329 = smul.addr %s328, 9
          %s330 = smul.addr %s326, 9
          %s331 = sadd.s32 %s329, %s330
          %s332 = smul.addr %s331, 4
          %s333 = scalar_lea.vmem %s0, %s332
        $region48: #{tpu_custom_call.1} parent=43 // pred_fallthru
          _
        // Predicated region
        $region49: #{tpu_custom_call.1} parent=43 // pred_check
          %p334 = pneg %p80
        $region50: #{tpu_custom_call.1} parent=43 // pred_check_branch
          %336 = sbr.rel (%p334) target = $region52
        $region51: #{tpu_custom_call.1} parent=43 // pred_region
          %s337 = smul.u32 2, %s26
          %p338 = scmp.lt.s32.totalorder %s25, 1
          %s339 = scalar_select %p338, %s25, 1
          %p340 = scmp.lt.s32.totalorder %s337, 1
          %s341 = scalar_select %p340, %s337, 1
          %s342 = smul.addr %s339, 2
          %s343 = sadd.s32 %s341, %s342
          %s344 = smul.addr %s343, 2
          %s345 = scalar_lea.vmem %s1, %s344
          %s346 = smul.u32 2, %s26
        $region52: #{tpu_custom_call.1} parent=43 // pred_fallthru
          _
      $region44: #{tpu_custom_call.1} parent=5 // pred_fallthru
        _
      %p347 = scmp.le.s32.totalorder 1, %s18
      %p348 = scmp.lt.s32.totalorder %s18, 3
      %p349 = pnand %p347, %p348
      %p350 = pneg %p349
      // Predicated region
      $region53: #{tpu_custom_call.1} parent=5 // pred_check
        _
      $region54: #{tpu_custom_call.1} parent=5 // pred_check_branch
        %352 = sbr.rel (%p349) target = $region56
      $region55: #{tpu_custom_call.1} parent=5 // pred_region
        %s353 = ssub.s32 %s18, 1
        %p354 = scmp.lt.s32.totalorder %s27, 1
        %s355 = scalar_select %p354, %s27, 1
        %p356 = scmp.lt.s32.totalorder %s28, 0
        %s357 = scalar_select %p356, %s28, 0
        %s358 = smul.addr %s357, 9
        %s359 = smul.addr %s355, 9
        %s360 = sadd.s32 %s358, %s359
        %s361 = smul.addr %s360, 4
        %s362 = scalar_lea.vmem %s0, %s361
        %p363 = pneg %p58
        %p364 = pneg %p55
        %s365 = smul.u32 2, %s28
        %p366 = scmp.lt.s32.totalorder %s27, 1
        %s367 = scalar_select %p366, %s27, 1
        %p368 = scmp.lt.s32.totalorder %s365, 1
        %s369 = scalar_select %p368, %s365, 1
        %s370 = smul.addr %s367, 2
        %s371 = sadd.s32 %s369, %s370
        %s372 = smul.addr %s371, 2
        %s373 = scalar_lea.vmem %s1, %s372
        %p374 = pneg %p86
        %p375 = pneg %p83
        %p376 = pneg %p107
        %p377 = pneg %p104
        %p378 = pneg %p128
        %p379 = pneg %p125
        %p380 = pneg %p149
        %p381 = pneg %p146
        %p382 = pneg %p170
        %p383 = pneg %p167
        %p384 = pneg %p191
        %p385 = pneg %p188
        %s386 = smul.u32 2, %s28
        %p387 = scmp.lt.s32.totalorder %s386, 1
        %s388 = scalar_select %p387, %s386, 1
        %s389 = scalar_lea.vmem %s7, %s388
        %p390 = pneg %p217
        %p391 = pneg %p214
        %s392 = smul.u32 2, %s28
        %p393 = scmp.lt.s32.totalorder %s392, 1
        %s394 = scalar_select %p393, %s392, 1
        %s395 = smul.addr %s394, 2
        %s396 = scalar_lea.vmem %s8, %s395
        %p397 = pneg %p243
        %p398 = pneg %p240
        %p399 = pneg %p271
        %p400 = pneg %p268
        %s401 = sand.u32 %s258, 1
        %s402 = scalar_lea.sflag [#allocation3], %s401
        %s403 = sand.u32 %s258, 1
        %s404 = smul.addr %s403, 4
        %s405 = scalar_lea.vmem [#allocation2], %s404
        %p406 = scmp.lt.s32.totalorder %s27, 1
        %s407 = scalar_select %p406, %s27, 1
        %p408 = scmp.lt.s32.totalorder %s28, 0
        %s409 = scalar_select %p408, %s28, 0
        %s410 = smul.addr %s409, 9
        %s411 = smul.addr %s407, 9
        %s412 = sadd.s32 %s410, %s411
        %s413 = smul.addr %s412, 4
        %s414 = scalar_lea.vmem %s0, %s413
        %s415 = smul.u32 2, %s28
        %p416 = scmp.lt.s32.totalorder %s27, 1
        %s417 = scalar_select %p416, %s27, 1
        %p418 = scmp.lt.s32.totalorder %s415, 1
        %s419 = scalar_select %p418, %s415, 1
        %s420 = smul.addr %s417, 2
        %s421 = sadd.s32 %s419, %s420
        %s422 = smul.addr %s421, 2
        %s423 = scalar_lea.vmem %s1, %s422
        %s424 = smul.u32 2, %s28
        %s425 = smul.u32 2, %s28
        %p426 = scmp.lt.s32.totalorder %s425, 1
        %s427 = scalar_select %p426, %s425, 1
        %s428 = scalar_lea.vmem %s7, %s427
        %s429 = smul.u32 2, %s28
        %s430 = smul.u32 2, %s28
        %p431 = scmp.lt.s32.totalorder %s430, 1
        %s432 = scalar_select %p431, %s430, 1
        %s433 = smul.addr %s432, 2
        %s434 = scalar_lea.vmem %s8, %s433
        %s435 = smul.u32 2, %s28
        %s436 = smul.u32 2, %s28
        %v438 = vld [vmem:[%s414] sm:$0xff]
        %v439 = vld [vmem:[%s414 + $0x8] sm:$0xf]
        %v440 = vld [vmem:[%s414 + $0xc] sm:$0xff]
        %v441 = vld [vmem:[%s414 + $0x14] sm:$0xf]
        %v442 = vld [vmem:[%s414 + $0x18] sm:$0xff]
        %v443 = vld [vmem:[%s414 + $0x20] sm:$0xf]
        %v444 = vld [vmem:[%s2] sm:$0xf]
        %v445 = vld [vmem:[%s2 + $0x4] sm:$0xf]
        %v446 = vld [vmem:[%s2 + $0x8] sm:$0xf]
        %v447 = vld [vmem:[%s2 + $0xc] sm:$0xf]
        %v448 = vld [vmem:[%s3] sm:$0xff]
        %v449 = vld [vmem:[%s3 + $0x8] sm:$0xff]
        %v450 = vld [vmem:[%s3 + $0x10] sm:$0xff]
        %v451 = vld [vmem:[%s3 + $0x18] sm:$0xff]
        %453 = vset.pattern.permute.xlu0 0
        %454 = vperm.xlu0 %453, %v448
        %v455 = vpop.permute.xlu0 %454
        %458 = vset.pattern.permute.xlu0 0
        %459 = vperm.xlu0 %458, %v449
        %v460 = vpop.permute.xlu0 %459
        %463 = vset.pattern.permute.xlu0 0
        %464 = vperm.xlu0 %463, %v450
        %v465 = vpop.permute.xlu0 %464
        %468 = vset.pattern.permute.xlu0 0
        %469 = vperm.xlu0 %468, %v451
        %v470 = vpop.permute.xlu0 %469
        %v476 = vunpack.c.l.b16 %v444
        %v477 = vunpack.c.l.b16 %v445
        %v478 = vunpack.c.l.b16 %v446
        %v479 = vunpack.c.l.b16 %v447
        %v480 = vpack.c.b16 %v477, %v476
        %v481 = vpack.c.b16 %v479, %v478
        %v488 = vunpack.c.l.b16 %v438
        %v489 = vunpack.c.h.b16 %v438
        %v490 = vunpack.c.l.b16 %v439
        %v491 = vunpack.c.l.b16 %v440
        %v492 = vunpack.c.h.b16 %v440
        %v493 = vunpack.c.l.b16 %v441
        %v494 = vunpack.c.l.b16 %v442
        %v495 = vunpack.c.h.b16 %v442
        %v496 = vunpack.c.l.b16 %v443
        %v497 = vpack.c.b16 %v491, %v488
        %v498 = vpack.c.b16 %v492, %v489
        %v499 = vpack.c.b16 %v493, %v490
        %v500 = vpack.c.b16 %v494, %v494
        %v501 = vpack.c.b16 %v495, %v495
        %v502 = vpack.c.b16 %v496, %v496
        %vm506 = vcmask 195584
        %v508 = vsel %vm506, %v480, 0
        %v511 = vsel %vm506, %v481, 0
        %vm513 = vcmask 1043456
        %v515 = vsel %vm513, %v500, 0
        %v518 = vsel %vm513, %v501, 0
        %v521 = vsel %vm513, %v502, 0
        %523 = vmatprep.subr.bf16.mxu0 %v498
        %524 = vmatpush1.bf16.msra.mxu0 %v497
        %525 = vmatprep.subr.bf16.mxu0 %v518
        %526 = vmatpush1.bf16.msra.mxu0 %v515
        %527 = vmatprep.subr.bf16.mxu0 0
        %528 = vmatpush1.bf16.msra.mxu0 0
        %529 = vmatprep.subr.bf16.mxu0 0
        %530 = vmatpush1.bf16.msra.mxu0 0
        %531 = vmatprep.subr.bf16.mxu0 0
        %532 = vmatpush1.bf16.msra.mxu0 0
        %533 = vmatprep.subr.bf16.mxu0 0
        %534 = vmatpush1.bf16.msra.mxu0 0
        %535 = vmatprep.subr.bf16.mxu0 0
        %536 = vmatpush1.bf16.msra.mxu0 0
        %537 = vmatprep.subr.bf16.mxu0 0
        %538 = vmatpush1.bf16.msra.mxu0 0
        %539 = vmatprep.subr.bf16.mxu0 0
        %540 = vmatpush1.bf16.msra.mxu0 0
        %541 = vmatprep.subr.bf16.mxu0 0
        %542 = vmatpush1.bf16.msra.mxu0 0
        %543 = vmatprep.subr.bf16.mxu0 0
        %544 = vmatpush1.bf16.msra.mxu0 0
        %545 = vmatprep.subr.bf16.mxu0 0
        %546 = vmatpush1.bf16.msra.mxu0 0
        %547 = vmatprep.subr.bf16.mxu0 0
        %548 = vmatpush1.bf16.msra.mxu0 0
        %549 = vmatprep.subr.bf16.mxu0 0
        %550 = vmatpush1.bf16.msra.mxu0 0
        %551 = vmatprep.subr.bf16.mxu0 0
        %552 = vmatpush1.bf16.msra.mxu0 0
        %553 = vmatprep.subr.bf16.mxu0 0
        %554 = vmatpush1.bf16.msra.mxu0 0
        %555 = vmatprep.mubr.bf16.mxu0 0
        %556 = vmatmul.mubr.bf16.gmra.mrb[0].mxu0 %v508
        %v557 = vpop.f32.mrb[0].mxu0
        %v558 = vadd.f32 %v455, %v557
        %v559 = vpop.f32.mrb[0].mxu0
        %v560 = vadd.f32 %v455, %v559
        %v561 = vpop.f32.mrb[0].mxu0
        %v562 = vadd.f32 %v460, %v561
        %v563 = vpop.f32.mrb[0].mxu0
        %v564 = vadd.f32 %v460, %v563
        %565 = vmatprep.mubr.bf16.mxu0 0
        %566 = vmatmul.mubr.bf16.gmra.mrb[0].mxu0 %v511
        %v567 = vpop.f32.mrb[0].mxu0
        %v568 = vadd.f32 %v465, %v567
        %v569 = vpop.f32.mrb[0].mxu0
        %v570 = vadd.f32 %v465, %v569
        %v571 = vpop.f32.mrb[0].mxu0
        %v572 = vadd.f32 %v470, %v571
        %v573 = vpop.f32.mrb[0].mxu0
        %v574 = vadd.f32 %v470, %v573
        %575 = vdwg.mxu0
        %576 = vmatprep.subr.bf16.mxu0 0
        %577 = vmatpush1.bf16.msra.mxu0 %v499
        %578 = vmatprep.subr.bf16.mxu0 0
        %579 = vmatpush1.bf16.msra.mxu0 %v521
        %580 = vmatprep.subr.bf16.mxu0 0
        %581 = vmatpush1.bf16.msra.mxu0 0
        %582 = vmatprep.subr.bf16.mxu0 0
        %583 = vmatpush1.bf16.msra.mxu0 0
        %584 = vmatprep.subr.bf16.mxu0 0
        %585 = vmatpush1.bf16.msra.mxu0 0
        %586 = vmatprep.subr.bf16.mxu0 0
        %587 = vmatpush1.bf16.msra.mxu0 0
        %588 = vmatprep.subr.bf16.mxu0 0
        %589 = vmatpush1.bf16.msra.mxu0 0
        %590 = vmatprep.subr.bf16.mxu0 0
        %591 = vmatpush1.bf16.msra.mxu0 0
        %592 = vmatprep.subr.bf16.mxu0 0
        %593 = vmatpush1.bf16.msra.mxu0 0
        %594 = vmatprep.subr.bf16.mxu0 0
        %595 = vmatpush1.bf16.msra.mxu0 0
        %596 = vmatprep.subr.bf16.mxu0 0
        %597 = vmatpush1.bf16.msra.mxu0 0
        %598 = vmatprep.subr.bf16.mxu0 0
        %599 = vmatpush1.bf16.msra.mxu0 0
        %600 = vmatprep.subr.bf16.mxu0 0
        %601 = vmatpush1.bf16.msra.mxu0 0
        %602 = vmatprep.subr.bf16.mxu0 0
        %603 = vmatpush1.bf16.msra.mxu0 0
        %604 = vmatprep.subr.bf16.mxu0 0
        %605 = vmatpush1.bf16.msra.mxu0 0
        %606 = vmatprep.subr.bf16.mxu0 0
        %607 = vmatpush1.bf16.msra.mxu0 0
        %608 = vmatprep.mubr.bf16.mxu0 0
        %609 = vmatmul.mubr.bf16.gmra.mrb[0].mxu0 %v508
        %v610 = vpop.f32.mrb[0].mxu0
        %v611 = vadd.f32 %v455, %v610
        %v612 = vpop.f32.mrb[0].mxu0
        %v613 = vpop.f32.mrb[0].mxu0
        %v614 = vadd.f32 %v460, %v613
        %v615 = vpop.f32.mrb[0].mxu0
        %616 = vmatprep.mubr.bf16.mxu0 0
        %617 = vmatmul.mubr.bf16.gmra.mrb[0].mxu0 %v511
        %v618 = vpop.f32.mrb[0].mxu0
        %v619 = vadd.f32 %v465, %v618
        %v620 = vpop.f32.mrb[0].mxu0
        %v621 = vpop.f32.mrb[0].mxu0
        %v622 = vadd.f32 %v470, %v621
        %v623 = vpop.f32.mrb[0].mxu0
        %624 = vdwg.mxu0
        %v625 = vmax.f32 %v558, 0.0
        %v626 = vmax.f32 %v560, 0.0
        %v627 = vmax.f32 %v611, 0.0
        %v628 = vmax.f32 %v562, 0.0
        %v629 = vmax.f32 %v564, 0.0
        %v630 = vmax.f32 %v614, 0.0
        %v631 = vmax.f32 %v568, 0.0
        %v632 = vmax.f32 %v570, 0.0
        %v633 = vmax.f32 %v619, 0.0
        %v634 = vmax.f32 %v572, 0.0
        %v635 = vmax.f32 %v574, 0.0
        %v636 = vmax.f32 %v622, 0.0
        %v637 = vpack.c.bf16 %v628, %v625
        %v638 = vpack.c.bf16 %v629, %v626
        %v639 = vpack.c.bf16 %v630, %v627
        %v640 = vpack.c.bf16 %v634, %v631
        %v641 = vpack.c.bf16 %v635, %v632
        %v642 = vpack.c.bf16 %v636, %v633
        %v643 = vld [vmem:[%s4] sm:$0xf]
        %v644 = vld [vmem:[%s4 + $0x4] sm:$0xf]
        %v645 = vld [vmem:[%s4 + $0x8] sm:$0xf]
        %v646 = vld [vmem:[%s4 + $0xc] sm:$0xf]
        %v647 = vld [vmem:[%s5] sm:$0xff]
        %v648 = vld [vmem:[%s5 + $0x8] sm:$0xff]
        %v649 = vld [vmem:[%s5 + $0x10] sm:$0xff]
        %v650 = vld [vmem:[%s5 + $0x18] sm:$0xff]
        %652 = vset.pattern.permute.xlu0 0
        %653 = vperm.xlu0 %652, %v647
        %v654 = vpop.permute.xlu0 %653
        %657 = vset.pattern.permute.xlu0 0
        %658 = vperm.xlu0 %657, %v648
        %v659 = vpop.permute.xlu0 %658
        %662 = vset.pattern.permute.xlu0 0
        %663 = vperm.xlu0 %662, %v649
        %v664 = vpop.permute.xlu0 %663
        %667 = vset.pattern.permute.xlu0 0
        %668 = vperm.xlu0 %667, %v650
        %v669 = vpop.permute.xlu0 %668
        %v675 = vunpack.c.l.b16 %v643
        %v676 = vunpack.c.l.b16 %v644
        %v677 = vunpack.c.l.b16 %v645
        %v678 = vunpack.c.l.b16 %v646
        %v679 = vpack.c.b16 %v676, %v675
        %v680 = vpack.c.b16 %v678, %v677
        %vm681 = vcmask 261120
        %v683 = vsel %vm681, %v679, 0
        %v686 = vsel %vm681, %v680, 0
        %688 = vmatprep.subr.bf16.mxu0 %v638
        %689 = vmatpush1.bf16.msra.mxu0 %v637
        %690 = vmatprep.subr.bf16.mxu0 %v641
        %691 = vmatpush1.bf16.msra.mxu0 %v640
        %692 = vmatprep.subr.bf16.mxu0 0
        %693 = vmatpush1.bf16.msra.mxu0 0
        %694 = vmatprep.subr.bf16.mxu0 0
        %695 = vmatpush1.bf16.msra.mxu0 0
        %696 = vmatprep.subr.bf16.mxu0 0
        %697 = vmatpush1.bf16.msra.mxu0 0
        %698 = vmatprep.subr.bf16.mxu0 0
        %699 = vmatpush1.bf16.msra.mxu0 0
        %700 = vmatprep.subr.bf16.mxu0 0
        %701 = vmatpush1.bf16.msra.mxu0 0
        %702 = vmatprep.subr.bf16.mxu0 0
        %703 = vmatpush1.bf16.msra.mxu0 0
        %704 = vmatprep.subr.bf16.mxu0 0
        %705 = vmatpush1.bf16.msra.mxu0 0
        %706 = vmatprep.subr.bf16.mxu0 0
        %707 = vmatpush1.bf16.msra.mxu0 0
        %708 = vmatprep.subr.bf16.mxu0 0
        %709 = vmatpush1.bf16.msra.mxu0 0
        %710 = vmatprep.subr.bf16.mxu0 0
        %711 = vmatpush1.bf16.msra.mxu0 0
        %712 = vmatprep.subr.bf16.mxu0 0
        %713 = vmatpush1.bf16.msra.mxu0 0
        %714 = vmatprep.subr.bf16.mxu0 0
        %715 = vmatpush1.bf16.msra.mxu0 0
        %716 = vmatprep.subr.bf16.mxu0 0
        %717 = vmatpush1.bf16.msra.mxu0 0
        %718 = vmatprep.subr.bf16.mxu0 0
        %719 = vmatpush1.bf16.msra.mxu0 0
        %720 = vmatprep.mubr.bf16.mxu0 0
        %721 = vmatmul.mubr.bf16.gmra.mrb[0].mxu0 %v683
        %v722 = vpop.f32.mrb[0].mxu0
        %v723 = vadd.f32 %v654, %v722
        %v724 = vpop.f32.mrb[0].mxu0
        %v725 = vadd.f32 %v654, %v724
        %v726 = vpop.f32.mrb[0].mxu0
        %v727 = vadd.f32 %v659, %v726
        %v728 = vpop.f32.mrb[0].mxu0
        %v729 = vadd.f32 %v659, %v728
        %730 = vmatprep.mubr.bf16.mxu0 0
        %731 = vmatmul.mubr.bf16.gmra.mrb[0].mxu0 %v686
        %v732 = vpop.f32.mrb[0].mxu0
        %v733 = vadd.f32 %v664, %v732
        %v734 = vpop.f32.mrb[0].mxu0
        %v735 = vadd.f32 %v664, %v734
        %v736 = vpop.f32.mrb[0].mxu0
        %v737 = vadd.f32 %v669, %v736
        %v738 = vpop.f32.mrb[0].mxu0
        %v739 = vadd.f32 %v669, %v738
        %740 = vdwg.mxu0
        %741 = vmatprep.subr.bf16.mxu0 0
        %742 = vmatpush1.bf16.msra.mxu0 %v639
        %743 = vmatprep.subr.bf16.mxu0 0
        %744 = vmatpush1.bf16.msra.mxu0 %v642
        %745 = vmatprep.subr.bf16.mxu0 0
        %746 = vmatpush1.bf16.msra.mxu0 0
        %747 = vmatprep.subr.bf16.mxu0 0
        %748 = vmatpush1.bf16.msra.mxu0 0
        %749 = vmatprep.subr.bf16.mxu0 0
        %750 = vmatpush1.bf16.msra.mxu0 0
        %751 = vmatprep.subr.bf16.mxu0 0
        %752 = vmatpush1.bf16.msra.mxu0 0
        %753 = vmatprep.subr.bf16.mxu0 0
        %754 = vmatpush1.bf16.msra.mxu0 0
        %755 = vmatprep.subr.bf16.mxu0 0
        %756 = vmatpush1.bf16.msra.mxu0 0
        %757 = vmatprep.subr.bf16.mxu0 0
        %758 = vmatpush1.bf16.msra.mxu0 0
        %759 = vmatprep.subr.bf16.mxu0 0
        %760 = vmatpush1.bf16.msra.mxu0 0
        %761 = vmatprep.subr.bf16.mxu0 0
        %762 = vmatpush1.bf16.msra.mxu0 0
        %763 = vmatprep.subr.bf16.mxu0 0
        %764 = vmatpush1.bf16.msra.mxu0 0
        %765 = vmatprep.subr.bf16.mxu0 0
        %766 = vmatpush1.bf16.msra.mxu0 0
        %767 = vmatprep.subr.bf16.mxu0 0
        %768 = vmatpush1.bf16.msra.mxu0 0
        %769 = vmatprep.subr.bf16.mxu0 0
        %770 = vmatpush1.bf16.msra.mxu0 0
        %771 = vmatprep.subr.bf16.mxu0 0
        %772 = vmatpush1.bf16.msra.mxu0 0
        %773 = vmatprep.mubr.bf16.mxu0 0
        %774 = vmatmul.mubr.bf16.gmra.mrb[0].mxu0 %v683
        %v775 = vpop.f32.mrb[0].mxu0
        %v776 = vadd.f32 %v654, %v775
        %v777 = vpop.f32.mrb[0].mxu0
        %v778 = vpop.f32.mrb[0].mxu0
        %v779 = vadd.f32 %v659, %v778
        %v780 = vpop.f32.mrb[0].mxu0
        %781 = vmatprep.mubr.bf16.mxu0 0
        %782 = vmatmul.mubr.bf16.gmra.mrb[0].mxu0 %v686
        %v783 = vpop.f32.mrb[0].mxu0
        %v784 = vadd.f32 %v664, %v783
        %v785 = vpop.f32.mrb[0].mxu0
        %v786 = vpop.f32.mrb[0].mxu0
        %v787 = vadd.f32 %v669, %v786
        %v788 = vpop.f32.mrb[0].mxu0
        %789 = vdwg.mxu0
        %v790 = vmax.f32 %v723, 0.0
        %v791 = vmax.f32 %v725, 0.0
        %v792 = vmax.f32 %v776, 0.0
        %v793 = vmax.f32 %v727, 0.0
        %v794 = vmax.f32 %v729, 0.0
        %v795 = vmax.f32 %v779, 0.0
        %v796 = vmax.f32 %v733, 0.0
        %v797 = vmax.f32 %v735, 0.0
        %v798 = vmax.f32 %v784, 0.0
        %v799 = vmax.f32 %v737, 0.0
        %v800 = vmax.f32 %v739, 0.0
        %v801 = vmax.f32 %v787, 0.0
        %v802 = vpack.c.bf16 %v793, %v790
        %v803 = vpack.c.bf16 %v794, %v791
        %v804 = vpack.c.bf16 %v795, %v792
        %v805 = vpack.c.bf16 %v799, %v796
        %v806 = vpack.c.bf16 %v800, %v797
        %v807 = vpack.c.bf16 %v801, %v798
        %v808 = vld [vmem:[%s434] sm:$0xf]
        %v809 = vld [vmem:[%s428] sm:$0x3]
        %v812 = vunpack.c.l.s4 1966171168
        %v813 = vunpack.c.0.s8 %v812
        %v814 = vlaneseq
        %v815 = vshrl.u32 %v814, 7
        %v816 = vsub.s32 %v813, %v815
        %v817 = vrot.slane %v809, %v816
        %v818 = vcombine.high %v817, %v817
        %v820 = vunpack.c.l.s4 1966171168
        %v821 = vunpack.c.0.s8 %v820
        %v822 = vlaneseq
        %v823 = vshrl.u32 %v822, 7
        %v824 = vsub.s32 %v821, %v823
        %v825 = vrot.slane %v817, %v824
        %v827 = vunpack.c.l.s4 1966171168
        %v828 = vunpack.c.0.s8 %v827
        %v829 = vlaneseq
        %v830 = vshrl.u32 %v829, 7
        %v831 = vsub.s32 %v828, %v830
        %v832 = vrot.slane %v818, %v831
        %v834 = vpack.i.b16 %v825, %v825
        %v836 = vlaneseq
        %v837 = vshrl.u32 %v836, 7
        %v838 = vsub.s32 0, %v837
        %v839 = vrot.slane %v834, %v838
        %v841 = vpack.i.b16 %v832, %v832
        %v843 = vlaneseq
        %v844 = vshrl.u32 %v843, 7
        %v845 = vsub.s32 0, %v844
        %v846 = vrot.slane %v841, %v845
        %v847 = vmul.bf16 %v802, %v839
        %v848 = vmul.bf16 %v803, %v846
        %v849 = vmul.bf16 %v805, %v839
        %v850 = vmul.bf16 %v806, %v846
        %v851 = vld [vmem:[%s6] sm:$0x1]
        %v853 = vsel %vm681, %v851, 0
        %855 = vmatprep.subr.bf16.mxu0 %v848
        %856 = vmatpush1.bf16.msra.mxu0 %v847
        %857 = vmatprep.subr.bf16.mxu0 %v850
        %858 = vmatpush1.bf16.msra.mxu0 %v849
        %859 = vmatprep.subr.bf16.mxu0 0
        %860 = vmatpush1.bf16.msra.mxu0 0
        %861 = vmatprep.subr.bf16.mxu0 0
        %862 = vmatpush1.bf16.msra.mxu0 0
        %863 = vmatprep.subr.bf16.mxu0 0
        %864 = vmatpush1.bf16.msra.mxu0 0
        %865 = vmatprep.subr.bf16.mxu0 0
        %866 = vmatpush1.bf16.msra.mxu0 0
        %867 = vmatprep.subr.bf16.mxu0 0
        %868 = vmatpush1.bf16.msra.mxu0 0
        %869 = vmatprep.subr.bf16.mxu0 0
        %870 = vmatpush1.bf16.msra.mxu0 0
        %871 = vmatprep.subr.bf16.mxu0 0
        %872 = vmatpush1.bf16.msra.mxu0 0
        %873 = vmatprep.subr.bf16.mxu0 0
        %874 = vmatpush1.bf16.msra.mxu0 0
        %875 = vmatprep.subr.bf16.mxu0 0
        %876 = vmatpush1.bf16.msra.mxu0 0
        %877 = vmatprep.subr.bf16.mxu0 0
        %878 = vmatpush1.bf16.msra.mxu0 0
        %879 = vmatprep.subr.bf16.mxu0 0
        %880 = vmatpush1.bf16.msra.mxu0 0
        %881 = vmatprep.subr.bf16.mxu0 0
        %882 = vmatpush1.bf16.msra.mxu0 0
        %883 = vmatprep.subr.bf16.mxu0 0
        %884 = vmatpush1.bf16.msra.mxu0 0
        %885 = vmatprep.subr.bf16.mxu0 0
        %886 = vmatpush1.bf16.msra.mxu0 0
        %887 = vmatprep.mubr.bf16.mxu0 0
        %888 = vmatmul.mubr.bf16.gmra.mrb[0].mxu0 %v853
        %v889 = vpop.f32.mrb[0].mxu0
        %v890 = vadd.f32 0.0, %v889
        %v891 = vpop.f32.mrb[0].mxu0
        %v892 = vadd.f32 0.0, %v891
        %v893 = vpop.f32.mrb[0].mxu0
        %v894 = vpop.f32.mrb[0].mxu0
        %895 = vdwg.mxu0
        %v898 = vcombine.low %v890, %v892
        %v900 = vunpack.c.l.s4 1983009808
        %v901 = vunpack.c.0.s8 %v900
        %v902 = vlaneseq
        %v903 = vshrl.u32 %v902, 7
        %v904 = vsub.s32 %v901, %v903
        %v905 = vrot.slane %v898, %v904
        %v907 = vadd.f32 %v808, %v905
        %s908 = scalar_lea.vmem %s428, 2
        %v909 = vld [vmem:[%s908] sm:$0x3]
        %v912 = vunpack.c.l.s4 1966171168
        %v913 = vunpack.c.0.s8 %v912
        %v914 = vlaneseq
        %v915 = vshrl.u32 %v914, 7
        %v916 = vsub.s32 %v913, %v915
        %v917 = vrot.slane %v909, %v916
        %v918 = vcombine.high %v917, %v917
        %v920 = vunpack.c.l.s4 1966171168
        %v921 = vunpack.c.0.s8 %v920
        %v922 = vlaneseq
        %v923 = vshrl.u32 %v922, 7
        %v924 = vsub.s32 %v921, %v923
        %v925 = vrot.slane %v917, %v924
        %v927 = vunpack.c.l.s4 1966171168
        %v928 = vunpack.c.0.s8 %v927
        %v929 = vlaneseq
        %v930 = vshrl.u32 %v929, 7
        %v931 = vsub.s32 %v928, %v930
        %v932 = vrot.slane %v918, %v931
        %v934 = vpack.i.b16 %v925, %v925
        %v936 = vlaneseq
        %v937 = vshrl.u32 %v936, 7
        %v938 = vsub.s32 0, %v937
        %v939 = vrot.slane %v934, %v938
        %v941 = vpack.i.b16 %v932, %v932
        %v943 = vlaneseq
        %v944 = vshrl.u32 %v943, 7
        %v945 = vsub.s32 0, %v944
        %v946 = vrot.slane %v941, %v945
        %949 = vrot.lane.b32.xlu0 %v939, 1
        %v950 = vpop.permute.xlu0 %949
        %951 = vrot.lane.b32.xlu0 %v946, 1
        %v952 = vpop.permute.xlu0 %951
        %vm953 = vcmask 7168
        %v954 = vsel %vm953, %v950, %v952
        %v958 = vmul.bf16 %v802, %v950
        %v959 = vmul.bf16 %v803, %v954
        %v960 = vmul.bf16 %v804, %v952
        %v961 = vmul.bf16 %v805, %v950
        %v962 = vmul.bf16 %v806, %v954
        %v963 = vmul.bf16 %v807, %v952
        %s964 = scalar_lea.vmem %s6, 1
        %v965 = vld [vmem:[%s964] sm:$0x1]
        %972 = vrot.lane.b32.xlu0 %v958, 127
        %v973 = vpop.permute.xlu0 %972
        %974 = vrot.lane.b32.xlu0 %v959, 127
        %v975 = vpop.permute.xlu0 %974
        %976 = vrot.lane.b32.xlu0 %v960, 127
        %v977 = vpop.permute.xlu0 %976
        %978 = vrot.lane.b32.xlu0 %v961, 127
        %v979 = vpop.permute.xlu0 %978
        %980 = vrot.lane.b32.xlu0 %v962, 127
        %v981 = vpop.permute.xlu0 %980
        %982 = vrot.lane.b32.xlu0 %v963, 127
        %v983 = vpop.permute.xlu0 %982
        %vm984 = vcmask 1039360
        %v985 = vsel %vm984, %v973, %v975
        %v986 = vsel %vm984, %v975, %v977
        %v987 = vsel %vm984, %v979, %v981
        %v988 = vsel %vm984, %v981, %v983
        %v994 = vsel %vm681, %v965, 0
        %996 = vmatprep.subr.bf16.mxu0 %v986
        %997 = vmatpush1.bf16.msra.mxu0 %v985
        %998 = vmatprep.subr.bf16.mxu0 %v988
        %999 = vmatpush1.bf16.msra.mxu0 %v987
        %1000 = vmatprep.subr.bf16.mxu0 0
        %1001 = vmatpush1.bf16.msra.mxu0 0
        %1002 = vmatprep.subr.bf16.mxu0 0
        %1003 = vmatpush1.bf16.msra.mxu0 0
        %1004 = vmatprep.subr.bf16.mxu0 0
        %1005 = vmatpush1.bf16.msra.mxu0 0
        %1006 = vmatprep.subr.bf16.mxu0 0
        %1007 = vmatpush1.bf16.msra.mxu0 0
        %1008 = vmatprep.subr.bf16.mxu0 0
        %1009 = vmatpush1.bf16.msra.mxu0 0
        %1010 = vmatprep.subr.bf16.mxu0 0
        %1011 = vmatpush1.bf16.msra.mxu0 0
        %1012 = vmatprep.subr.bf16.mxu0 0
        %1013 = vmatpush1.bf16.msra.mxu0 0
        %1014 = vmatprep.subr.bf16.mxu0 0
        %1015 = vmatpush1.bf16.msra.mxu0 0
        %1016 = vmatprep.subr.bf16.mxu0 0
        %1017 = vmatpush1.bf16.msra.mxu0 0
        %1018 = vmatprep.subr.bf16.mxu0 0
        %1019 = vmatpush1.bf16.msra.mxu0 0
        %1020 = vmatprep.subr.bf16.mxu0 0
        %1021 = vmatpush1.bf16.msra.mxu0 0
        %1022 = vmatprep.subr.bf16.mxu0 0
        %1023 = vmatpush1.bf16.msra.mxu0 0
        %1024 = vmatprep.subr.bf16.mxu0 0
        %1025 = vmatpush1.bf16.msra.mxu0 0
        %1026 = vmatprep.subr.bf16.mxu0 0
        %1027 = vmatpush1.bf16.msra.mxu0 0
        %1028 = vmatprep.mubr.bf16.mxu0 0
        %1029 = vmatmul.mubr.bf16.gmra.mrb[0].mxu0 %v994
        %v1030 = vpop.f32.mrb[0].mxu0
        %v1031 = vadd.f32 0.0, %v1030
        %v1032 = vpop.f32.mrb[0].mxu0
        %v1033 = vadd.f32 0.0, %v1032
        %v1034 = vpop.f32.mrb[0].mxu0
        %v1035 = vpop.f32.mrb[0].mxu0
        %1036 = vdwg.mxu0
        %v1039 = vcombine.low %v1031, %v1033
        %v1041 = vunpack.c.l.s4 1983009808
        %v1042 = vunpack.c.0.s8 %v1041
        %v1043 = vlaneseq
        %v1044 = vshrl.u32 %v1043, 7
        %v1045 = vsub.s32 %v1042, %v1044
        %v1046 = vrot.slane %v1039, %v1045
        %v1048 = vadd.f32 %v907, %v1046
        %s1049 = scalar_lea.vmem %s428, 4
        %v1050 = vld [vmem:[%s1049] sm:$0x3]
        %v1053 = vunpack.c.l.s4 1966171168
        %v1054 = vunpack.c.0.s8 %v1053
        %v1055 = vlaneseq
        %v1056 = vshrl.u32 %v1055, 7
        %v1057 = vsub.s32 %v1054, %v1056
        %v1058 = vrot.slane %v1050, %v1057
        %v1059 = vcombine.high %v1058, %v1058
        %v1061 = vunpack.c.l.s4 1966171168
        %v1062 = vunpack.c.0.s8 %v1061
        %v1063 = vlaneseq
        %v1064 = vshrl.u32 %v1063, 7
        %v1065 = vsub.s32 %v1062, %v1064
        %v1066 = vrot.slane %v1058, %v1065
        %v1068 = vunpack.c.l.s4 1966171168
        %v1069 = vunpack.c.0.s8 %v1068
        %v1070 = vlaneseq
        %v1071 = vshrl.u32 %v1070, 7
        %v1072 = vsub.s32 %v1069, %v1071
        %v1073 = vrot.slane %v1059, %v1072
        %v1075 = vpack.i.b16 %v1066, %v1066
        %v1077 = vlaneseq
        %v1078 = vshrl.u32 %v1077, 7
        %v1079 = vsub.s32 0, %v1078
        %v1080 = vrot.slane %v1075, %v1079
        %v1082 = vpack.i.b16 %v1073, %v1073
        %v1084 = vlaneseq
        %v1085 = vshrl.u32 %v1084, 7
        %v1086 = vsub.s32 0, %v1085
        %v1087 = vrot.slane %v1082, %v1086
        %1090 = vrot.lane.b32.xlu0 %v1080, 2
        %v1091 = vpop.permute.xlu0 %1090
        %1092 = vrot.lane.b32.xlu0 %v1087, 2
        %v1093 = vpop.permute.xlu0 %1092
        %vm1094 = vcmask 15360
        %v1095 = vsel %vm1094, %v1091, %v1093
        %v1099 = vmul.bf16 %v802, %v1091
        %v1100 = vmul.bf16 %v803, %v1095
        %v1101 = vmul.bf16 %v804, %v1093
        %v1102 = vmul.bf16 %v805, %v1091
        %v1103 = vmul.bf16 %v806, %v1095
        %v1104 = vmul.bf16 %v807, %v1093
        %s1105 = scalar_lea.vmem %s6, 2
        %v1106 = vld [vmem:[%s1105] sm:$0x1]
        %1113 = vrot.lane.b32.xlu0 %v1099, 126
        %v1114 = vpop.permute.xlu0 %1113
        %1115 = vrot.lane.b32.xlu0 %v1100, 126
        %v1116 = vpop.permute.xlu0 %1115
        %1117 = vrot.lane.b32.xlu0 %v1101, 126
        %v1118 = vpop.permute.xlu0 %1117
        %1119 = vrot.lane.b32.xlu0 %v1102, 126
        %v1120 = vpop.permute.xlu0 %1119
        %1121 = vrot.lane.b32.xlu0 %v1103, 126
        %v1122 = vpop.permute.xlu0 %1121
        %1123 = vrot.lane.b32.xlu0 %v1104, 126
        %v1124 = vpop.permute.xlu0 %1123
        %vm1125 = vcmask 1031168
        %v1126 = vsel %vm1125, %v1114, %v1116
        %v1127 = vsel %vm1125, %v1116, %v1118
        %v1128 = vsel %vm1125, %v1120, %v1122
        %v1129 = vsel %vm1125, %v1122, %v1124
        %v1135 = vsel %vm681, %v1106, 0
        %1137 = vmatprep.subr.bf16.mxu0 %v1127
        %1138 = vmatpush1.bf16.msra.mxu0 %v1126
        %1139 = vmatprep.subr.bf16.mxu0 %v1129
        %1140 = vmatpush1.bf16.msra.mxu0 %v1128
        %1141 = vmatprep.subr.bf16.mxu0 0
        %1142 = vmatpush1.bf16.msra.mxu0 0
        %1143 = vmatprep.subr.bf16.mxu0 0
        %1144 = vmatpush1.bf16.msra.mxu0 0
        %1145 = vmatprep.subr.bf16.mxu0 0
        %1146 = vmatpush1.bf16.msra.mxu0 0
        %1147 = vmatprep.subr.bf16.mxu0 0
        %1148 = vmatpush1.bf16.msra.mxu0 0
        %1149 = vmatprep.subr.bf16.mxu0 0
        %1150 = vmatpush1.bf16.msra.mxu0 0
        %1151 = vmatprep.subr.bf16.mxu0 0
        %1152 = vmatpush1.bf16.msra.mxu0 0
        %1153 = vmatprep.subr.bf16.mxu0 0
        %1154 = vmatpush1.bf16.msra.mxu0 0
        %1155 = vmatprep.subr.bf16.mxu0 0
        %1156 = vmatpush1.bf16.msra.mxu0 0
        %1157 = vmatprep.subr.bf16.mxu0 0
        %1158 = vmatpush1.bf16.msra.mxu0 0
        %1159 = vmatprep.subr.bf16.mxu0 0
        %1160 = vmatpush1.bf16.msra.mxu0 0
        %1161 = vmatprep.subr.bf16.mxu0 0
        %1162 = vmatpush1.bf16.msra.mxu0 0
        %1163 = vmatprep.subr.bf16.mxu0 0
        %1164 = vmatpush1.bf16.msra.mxu0 0
        %1165 = vmatprep.subr.bf16.mxu0 0
        %1166 = vmatpush1.bf16.msra.mxu0 0
        %1167 = vmatprep.subr.bf16.mxu0 0
        %1168 = vmatpush1.bf16.msra.mxu0 0
        %1169 = vmatprep.mubr.bf16.mxu0 0
        %1170 = vmatmul.mubr.bf16.gmra.mrb[0].mxu0 %v1135
        %v1171 = vpop.f32.mrb[0].mxu0
        %v1172 = vadd.f32 0.0, %v1171
        %v1173 = vpop.f32.mrb[0].mxu0
        %v1174 = vadd.f32 0.0, %v1173
        %v1175 = vpop.f32.mrb[0].mxu0
        %v1176 = vpop.f32.mrb[0].mxu0
        %1177 = vdwg.mxu0
        %v1180 = vcombine.low %v1172, %v1174
        %v1182 = vunpack.c.l.s4 1983009808
        %v1183 = vunpack.c.0.s8 %v1182
        %v1184 = vlaneseq
        %v1185 = vshrl.u32 %v1184, 7
        %v1186 = vsub.s32 %v1183, %v1185
        %v1187 = vrot.slane %v1180, %v1186
        %v1189 = vadd.f32 %v1048, %v1187
        %s1190 = scalar_lea.vmem %s428, 6
        %v1191 = vld [vmem:[%s1190] sm:$0x3]
        %v1194 = vunpack.c.l.s4 1966171168
        %v1195 = vunpack.c.0.s8 %v1194
        %v1196 = vlaneseq
        %v1197 = vshrl.u32 %v1196, 7
        %v1198 = vsub.s32 %v1195, %v1197
        %v1199 = vrot.slane %v1191, %v1198
        %v1200 = vcombine.high %v1199, %v1199
        %v1202 = vunpack.c.l.s4 1966171168
        %v1203 = vunpack.c.0.s8 %v1202
        %v1204 = vlaneseq
        %v1205 = vshrl.u32 %v1204, 7
        %v1206 = vsub.s32 %v1203, %v1205
        %v1207 = vrot.slane %v1199, %v1206
        %v1209 = vunpack.c.l.s4 1966171168
        %v1210 = vunpack.c.0.s8 %v1209
        %v1211 = vlaneseq
        %v1212 = vshrl.u32 %v1211, 7
        %v1213 = vsub.s32 %v1210, %v1212
        %v1214 = vrot.slane %v1200, %v1213
        %v1216 = vpack.i.b16 %v1207, %v1207
        %v1218 = vlaneseq
        %v1219 = vshrl.u32 %v1218, 7
        %v1220 = vsub.s32 0, %v1219
        %v1221 = vrot.slane %v1216, %v1220
        %v1223 = vpack.i.b16 %v1214, %v1214
        %v1225 = vlaneseq
        %v1226 = vshrl.u32 %v1225, 7
        %v1227 = vsub.s32 0, %v1226
        %v1228 = vrot.slane %v1223, %v1227
        %1231 = vrot.lane.b32.xlu0 %v1221, 16
        %v1232 = vpop.permute.xlu0 %1231
        %1233 = vrot.lane.b32.xlu0 %v1228, 16
        %v1234 = vpop.permute.xlu0 %1233
        %vm1235 = vcmask 130048
        %v1236 = vsel %vm1235, %v1232, %v1234
        %v1240 = vmul.bf16 %v802, %v1232
        %v1241 = vmul.bf16 %v803, %v1236
        %v1242 = vmul.bf16 %v804, %v1234
        %v1243 = vmul.bf16 %v805, %v1232
        %v1244 = vmul.bf16 %v806, %v1236
        %v1245 = vmul.bf16 %v807, %v1234
        %s1246 = scalar_lea.vmem %s6, 3
        %v1247 = vld [vmem:[%s1246] sm:$0x1]
        %1254 = vrot.lane.b32.xlu0 %v1240, 112
        %v1255 = vpop.permute.xlu0 %1254
        %1256 = vrot.lane.b32.xlu0 %v1241, 112
        %v1257 = vpop.permute.xlu0 %1256
        %1258 = vrot.lane.b32.xlu0 %v1242, 112
        %v1259 = vpop.permute.xlu0 %1258
        %1260 = vrot.lane.b32.xlu0 %v1243, 112
        %v1261 = vpop.permute.xlu0 %1260
        %1262 = vrot.lane.b32.xlu0 %v1244, 112
        %v1263 = vpop.permute.xlu0 %1262
        %1264 = vrot.lane.b32.xlu0 %v1245, 112
        %v1265 = vpop.permute.xlu0 %1264
        %vm1266 = vcmask 916480
        %v1267 = vsel %vm1266, %v1255, %v1257
        %v1268 = vsel %vm1266, %v1257, %v1259
        %v1269 = vsel %vm1266, %v1261, %v1263
        %v1270 = vsel %vm1266, %v1263, %v1265
        %v1276 = vsel %vm681, %v1247, 0
        %1278 = vmatprep.subr.bf16.mxu0 %v1268
        %1279 = vmatpush1.bf16.msra.mxu0 %v1267
        %1280 = vmatprep.subr.bf16.mxu0 %v1270
        %1281 = vmatpush1.bf16.msra.mxu0 %v1269
        %1282 = vmatprep.subr.bf16.mxu0 0
        %1283 = vmatpush1.bf16.msra.mxu0 0
        %1284 = vmatprep.subr.bf16.mxu0 0
        %1285 = vmatpush1.bf16.msra.mxu0 0
        %1286 = vmatprep.subr.bf16.mxu0 0
        %1287 = vmatpush1.bf16.msra.mxu0 0
        %1288 = vmatprep.subr.bf16.mxu0 0
        %1289 = vmatpush1.bf16.msra.mxu0 0
        %1290 = vmatprep.subr.bf16.mxu0 0
        %1291 = vmatpush1.bf16.msra.mxu0 0
        %1292 = vmatprep.subr.bf16.mxu0 0
        %1293 = vmatpush1.bf16.msra.mxu0 0
        %1294 = vmatprep.subr.bf16.mxu0 0
        %1295 = vmatpush1.bf16.msra.mxu0 0
        %1296 = vmatprep.subr.bf16.mxu0 0
        %1297 = vmatpush1.bf16.msra.mxu0 0
        %1298 = vmatprep.subr.bf16.mxu0 0
        %1299 = vmatpush1.bf16.msra.mxu0 0
        %1300 = vmatprep.subr.bf16.mxu0 0
        %1301 = vmatpush1.bf16.msra.mxu0 0
        %1302 = vmatprep.subr.bf16.mxu0 0
        %1303 = vmatpush1.bf16.msra.mxu0 0
        %1304 = vmatprep.subr.bf16.mxu0 0
        %1305 = vmatpush1.bf16.msra.mxu0 0
        %1306 = vmatprep.subr.bf16.mxu0 0
        %1307 = vmatpush1.bf16.msra.mxu0 0
        %1308 = vmatprep.subr.bf16.mxu0 0
        %1309 = vmatpush1.bf16.msra.mxu0 0
        %1310 = vmatprep.mubr.bf16.mxu0 0
        %1311 = vmatmul.mubr.bf16.gmra.mrb[0].mxu0 %v1276
        %v1312 = vpop.f32.mrb[0].mxu0
        %v1313 = vadd.f32 0.0, %v1312
        %v1314 = vpop.f32.mrb[0].mxu0
        %v1315 = vadd.f32 0.0, %v1314
        %v1316 = vpop.f32.mrb[0].mxu0
        %v1317 = vpop.f32.mrb[0].mxu0
        %1318 = vdwg.mxu0
        %v1321 = vcombine.low %v1313, %v1315
        %v1323 = vunpack.c.l.s4 1983009808
        %v1324 = vunpack.c.0.s8 %v1323
        %v1325 = vlaneseq
        %v1326 = vshrl.u32 %v1325, 7
        %v1327 = vsub.s32 %v1324, %v1326
        %v1328 = vrot.slane %v1321, %v1327
        %v1330 = vadd.f32 %v1189, %v1328
        %s1331 = scalar_lea.vmem %s428, 8
        %v1332 = vld [vmem:[%s1331] sm:$0x3]
        %v1335 = vunpack.c.l.s4 1966171168
        %v1336 = vunpack.c.0.s8 %v1335
        %v1337 = vlaneseq
        %v1338 = vshrl.u32 %v1337, 7
        %v1339 = vsub.s32 %v1336, %v1338
        %v1340 = vrot.slane %v1332, %v1339
        %v1341 = vcombine.high %v1340, %v1340
        %v1343 = vunpack.c.l.s4 1966171168
        %v1344 = vunpack.c.0.s8 %v1343
        %v1345 = vlaneseq
        %v1346 = vshrl.u32 %v1345, 7
        %v1347 = vsub.s32 %v1344, %v1346
        %v1348 = vrot.slane %v1340, %v1347
        %v1350 = vunpack.c.l.s4 1966171168
        %v1351 = vunpack.c.0.s8 %v1350
        %v1352 = vlaneseq
        %v1353 = vshrl.u32 %v1352, 7
        %v1354 = vsub.s32 %v1351, %v1353
        %v1355 = vrot.slane %v1341, %v1354
        %v1357 = vpack.i.b16 %v1348, %v1348
        %v1359 = vlaneseq
        %v1360 = vshrl.u32 %v1359, 7
        %v1361 = vsub.s32 0, %v1360
        %v1362 = vrot.slane %v1357, %v1361
        %v1364 = vpack.i.b16 %v1355, %v1355
        %v1366 = vlaneseq
        %v1367 = vshrl.u32 %v1366, 7
        %v1368 = vsub.s32 0, %v1367
        %v1369 = vrot.slane %v1364, %v1368
        %1372 = vrot.lane.b32.xlu0 %v1362, 17
        %v1373 = vpop.permute.xlu0 %1372
        %1374 = vrot.lane.b32.xlu0 %v1369, 17
        %v1375 = vpop.permute.xlu0 %1374
        %vm1376 = vcmask 138240
        %v1377 = vsel %vm1376, %v1373, %v1375
        %v1381 = vmul.bf16 %v802, %v1373
        %v1382 = vmul.bf16 %v803, %v1377
        %v1383 = vmul.bf16 %v804, %v1375
        %v1384 = vmul.bf16 %v805, %v1373
        %v1385 = vmul.bf16 %v806, %v1377
        %v1386 = vmul.bf16 %v807, %v1375
        %s1387 = scalar_lea.vmem %s6, 4
        %v1388 = vld [vmem:[%s1387] sm:$0x1]
        %1395 = vrot.lane.b32.xlu0 %v1381, 111
        %v1396 = vpop.permute.xlu0 %1395
        %1397 = vrot.lane.b32.xlu0 %v1382, 111
        %v1398 = vpop.permute.xlu0 %1397
        %1399 = vrot.lane.b32.xlu0 %v1383, 111
        %v1400 = vpop.permute.xlu0 %1399
        %1401 = vrot.lane.b32.xlu0 %v1384, 111
        %v1402 = vpop.permute.xlu0 %1401
        %1403 = vrot.lane.b32.xlu0 %v1385, 111
        %v1404 = vpop.permute.xlu0 %1403
        %1405 = vrot.lane.b32.xlu0 %v1386, 111
        %v1406 = vpop.permute.xlu0 %1405
        %vm1407 = vcmask 908288
        %v1408 = vsel %vm1407, %v1396, %v1398
        %v1409 = vsel %vm1407, %v1398, %v1400
        %v1410 = vsel %vm1407, %v1402, %v1404
        %v1411 = vsel %vm1407, %v1404, %v1406
        %v1417 = vsel %vm681, %v1388, 0
        %1419 = vmatprep.subr.bf16.mxu0 %v1409
        %1420 = vmatpush1.bf16.msra.mxu0 %v1408
        %1421 = vmatprep.subr.bf16.mxu0 %v1411
        %1422 = vmatpush1.bf16.msra.mxu0 %v1410
        %1423 = vmatprep.subr.bf16.mxu0 0
        %1424 = vmatpush1.bf16.msra.mxu0 0
        %1425 = vmatprep.subr.bf16.mxu0 0
        %1426 = vmatpush1.bf16.msra.mxu0 0
        %1427 = vmatprep.subr.bf16.mxu0 0
        %1428 = vmatpush1.bf16.msra.mxu0 0
        %1429 = vmatprep.subr.bf16.mxu0 0
        %1430 = vmatpush1.bf16.msra.mxu0 0
        %1431 = vmatprep.subr.bf16.mxu0 0
        %1432 = vmatpush1.bf16.msra.mxu0 0
        %1433 = vmatprep.subr.bf16.mxu0 0
        %1434 = vmatpush1.bf16.msra.mxu0 0
        %1435 = vmatprep.subr.bf16.mxu0 0
        %1436 = vmatpush1.bf16.msra.mxu0 0
        %1437 = vmatprep.subr.bf16.mxu0 0
        %1438 = vmatpush1.bf16.msra.mxu0 0
        %1439 = vmatprep.subr.bf16.mxu0 0
        %1440 = vmatpush1.bf16.msra.mxu0 0
        %1441 = vmatprep.subr.bf16.mxu0 0
        %1442 = vmatpush1.bf16.msra.mxu0 0
        %1443 = vmatprep.subr.bf16.mxu0 0
        %1444 = vmatpush1.bf16.msra.mxu0 0
        %1445 = vmatprep.subr.bf16.mxu0 0
        %1446 = vmatpush1.bf16.msra.mxu0 0
        %1447 = vmatprep.subr.bf16.mxu0 0
        %1448 = vmatpush1.bf16.msra.mxu0 0
        %1449 = vmatprep.subr.bf16.mxu0 0
        %1450 = vmatpush1.bf16.msra.mxu0 0
        %1451 = vmatprep.mubr.bf16.mxu0 0
        %1452 = vmatmul.mubr.bf16.gmra.mrb[0].mxu0 %v1417
        %v1453 = vpop.f32.mrb[0].mxu0
        %v1454 = vadd.f32 0.0, %v1453
        %v1455 = vpop.f32.mrb[0].mxu0
        %v1456 = vadd.f32 0.0, %v1455
        %v1457 = vpop.f32.mrb[0].mxu0
        %v1458 = vpop.f32.mrb[0].mxu0
        %1459 = vdwg.mxu0
        %v1462 = vcombine.low %v1454, %v1456
        %v1464 = vunpack.c.l.s4 1983009808
        %v1465 = vunpack.c.0.s8 %v1464
        %v1466 = vlaneseq
        %v1467 = vshrl.u32 %v1466, 7
        %v1468 = vsub.s32 %v1465, %v1467
        %v1469 = vrot.slane %v1462, %v1468
        %v1471 = vadd.f32 %v1330, %v1469
        %s1472 = scalar_lea.vmem %s428, 10
        %v1473 = vld [vmem:[%s1472] sm:$0x3]
        %v1476 = vunpack.c.l.s4 1966171168
        %v1477 = vunpack.c.0.s8 %v1476
        %v1478 = vlaneseq
        %v1479 = vshrl.u32 %v1478, 7
        %v1480 = vsub.s32 %v1477, %v1479
        %v1481 = vrot.slane %v1473, %v1480
        %v1482 = vcombine.high %v1481, %v1481
        %v1484 = vunpack.c.l.s4 1966171168
        %v1485 = vunpack.c.0.s8 %v1484
        %v1486 = vlaneseq
        %v1487 = vshrl.u32 %v1486, 7
        %v1488 = vsub.s32 %v1485, %v1487
        %v1489 = vrot.slane %v1481, %v1488
        %v1491 = vunpack.c.l.s4 1966171168
        %v1492 = vunpack.c.0.s8 %v1491
        %v1493 = vlaneseq
        %v1494 = vshrl.u32 %v1493, 7
        %v1495 = vsub.s32 %v1492, %v1494
        %v1496 = vrot.slane %v1482, %v1495
        %v1498 = vpack.i.b16 %v1489, %v1489
        %v1500 = vlaneseq
        %v1501 = vshrl.u32 %v1500, 7
        %v1502 = vsub.s32 0, %v1501
        %v1503 = vrot.slane %v1498, %v1502
        %v1505 = vpack.i.b16 %v1496, %v1496
        %v1507 = vlaneseq
        %v1508 = vshrl.u32 %v1507, 7
        %v1509 = vsub.s32 0, %v1508
        %v1510 = vrot.slane %v1505, %v1509
        %1513 = vrot.lane.b32.xlu0 %v1503, 18
        %v1514 = vpop.permute.xlu0 %1513
        %1515 = vrot.lane.b32.xlu0 %v1510, 18
        %v1516 = vpop.permute.xlu0 %1515
        %vm1517 = vcmask 146432
        %v1518 = vsel %vm1517, %v1514, %v1516
        %v1522 = vmul.bf16 %v802, %v1514
        %v1523 = vmul.bf16 %v803, %v1518
        %v1524 = vmul.bf16 %v804, %v1516
        %v1525 = vmul.bf16 %v805, %v1514
        %v1526 = vmul.bf16 %v806, %v1518
        %v1527 = vmul.bf16 %v807, %v1516
        %s1528 = scalar_lea.vmem %s6, 5
        %v1529 = vld [vmem:[%s1528] sm:$0x1]
        %1536 = vrot.lane.b32.xlu0 %v1522, 110
        %v1537 = vpop.permute.xlu0 %1536
        %1538 = vrot.lane.b32.xlu0 %v1523, 110
        %v1539 = vpop.permute.xlu0 %1538
        %1540 = vrot.lane.b32.xlu0 %v1524, 110
        %v1541 = vpop.permute.xlu0 %1540
        %1542 = vrot.lane.b32.xlu0 %v1525, 110
        %v1543 = vpop.permute.xlu0 %1542
        %1544 = vrot.lane.b32.xlu0 %v1526, 110
        %v1545 = vpop.permute.xlu0 %1544
        %1546 = vrot.lane.b32.xlu0 %v1527, 110
        %v1547 = vpop.permute.xlu0 %1546
        %vm1548 = vcmask 900096
        %v1549 = vsel %vm1548, %v1537, %v1539
        %v1550 = vsel %vm1548, %v1539, %v1541
        %v1551 = vsel %vm1548, %v1543, %v1545
        %v1552 = vsel %vm1548, %v1545, %v1547
        %v1558 = vsel %vm681, %v1529, 0
        %1560 = vmatprep.subr.bf16.mxu0 %v1550
        %1561 = vmatpush1.bf16.msra.mxu0 %v1549
        %1562 = vmatprep.subr.bf16.mxu0 %v1552
        %1563 = vmatpush1.bf16.msra.mxu0 %v1551
        %1564 = vmatprep.subr.bf16.mxu0 0
        %1565 = vmatpush1.bf16.msra.mxu0 0
        %1566 = vmatprep.subr.bf16.mxu0 0
        %1567 = vmatpush1.bf16.msra.mxu0 0
        %1568 = vmatprep.subr.bf16.mxu0 0
        %1569 = vmatpush1.bf16.msra.mxu0 0
        %1570 = vmatprep.subr.bf16.mxu0 0
        %1571 = vmatpush1.bf16.msra.mxu0 0
        %1572 = vmatprep.subr.bf16.mxu0 0
        %1573 = vmatpush1.bf16.msra.mxu0 0
        %1574 = vmatprep.subr.bf16.mxu0 0
        %1575 = vmatpush1.bf16.msra.mxu0 0
        %1576 = vmatprep.subr.bf16.mxu0 0
        %1577 = vmatpush1.bf16.msra.mxu0 0
        %1578 = vmatprep.subr.bf16.mxu0 0
        %1579 = vmatpush1.bf16.msra.mxu0 0
        %1580 = vmatprep.subr.bf16.mxu0 0
        %1581 = vmatpush1.bf16.msra.mxu0 0
        %1582 = vmatprep.subr.bf16.mxu0 0
        %1583 = vmatpush1.bf16.msra.mxu0 0
        %1584 = vmatprep.subr.bf16.mxu0 0
        %1585 = vmatpush1.bf16.msra.mxu0 0
        %1586 = vmatprep.subr.bf16.mxu0 0
        %1587 = vmatpush1.bf16.msra.mxu0 0
        %1588 = vmatprep.subr.bf16.mxu0 0
        %1589 = vmatpush1.bf16.msra.mxu0 0
        %1590 = vmatprep.subr.bf16.mxu0 0
        %1591 = vmatpush1.bf16.msra.mxu0 0
        %1592 = vmatprep.mubr.bf16.mxu0 0
        %1593 = vmatmul.mubr.bf16.gmra.mrb[0].mxu0 %v1558
        %v1594 = vpop.f32.mrb[0].mxu0
        %v1595 = vadd.f32 0.0, %v1594
        %v1596 = vpop.f32.mrb[0].mxu0
        %v1597 = vadd.f32 0.0, %v1596
        %v1598 = vpop.f32.mrb[0].mxu0
        %v1599 = vpop.f32.mrb[0].mxu0
        %1600 = vdwg.mxu0
        %v1603 = vcombine.low %v1595, %v1597
        %v1605 = vunpack.c.l.s4 1983009808
        %v1606 = vunpack.c.0.s8 %v1605
        %v1607 = vlaneseq
        %v1608 = vshrl.u32 %v1607, 7
        %v1609 = vsub.s32 %v1606, %v1608
        %v1610 = vrot.slane %v1603, %v1609
        %v1612 = vadd.f32 %v1471, %v1610
        %s1613 = scalar_lea.vmem %s428, 12
        %v1614 = vld [vmem:[%s1613] sm:$0x3]
        %v1617 = vunpack.c.l.s4 1966171168
        %v1618 = vunpack.c.0.s8 %v1617
        %v1619 = vlaneseq
        %v1620 = vshrl.u32 %v1619, 7
        %v1621 = vsub.s32 %v1618, %v1620
        %v1622 = vrot.slane %v1614, %v1621
        %v1623 = vcombine.high %v1622, %v1622
        %v1625 = vunpack.c.l.s4 1966171168
        %v1626 = vunpack.c.0.s8 %v1625
        %v1627 = vlaneseq
        %v1628 = vshrl.u32 %v1627, 7
        %v1629 = vsub.s32 %v1626, %v1628
        %v1630 = vrot.slane %v1622, %v1629
        %v1632 = vunpack.c.l.s4 1966171168
        %v1633 = vunpack.c.0.s8 %v1632
        %v1634 = vlaneseq
        %v1635 = vshrl.u32 %v1634, 7
        %v1636 = vsub.s32 %v1633, %v1635
        %v1637 = vrot.slane %v1623, %v1636
        %v1639 = vpack.i.b16 %v1630, %v1630
        %v1641 = vlaneseq
        %v1642 = vshrl.u32 %v1641, 7
        %v1643 = vsub.s32 0, %v1642
        %v1644 = vrot.slane %v1639, %v1643
        %v1646 = vpack.i.b16 %v1637, %v1637
        %v1648 = vlaneseq
        %v1649 = vshrl.u32 %v1648, 7
        %v1650 = vsub.s32 0, %v1649
        %v1651 = vrot.slane %v1646, %v1650
        %1654 = vrot.lane.b32.xlu0 %v1644, 32
        %v1655 = vpop.permute.xlu0 %1654
        %1656 = vrot.lane.b32.xlu0 %v1651, 32
        %v1657 = vpop.permute.xlu0 %1656
        %vm1658 = vcmask 261120
        %v1659 = vsel %vm1658, %v1655, %v1657
        %v1663 = vmul.bf16 %v802, %v1655
        %v1664 = vmul.bf16 %v803, %v1659
        %v1665 = vmul.bf16 %v804, %v1657
        %v1666 = vmul.bf16 %v805, %v1655
        %v1667 = vmul.bf16 %v806, %v1659
        %v1668 = vmul.bf16 %v807, %v1657
        %s1669 = scalar_lea.vmem %s6, 6
        %v1670 = vld [vmem:[%s1669] sm:$0x1]
        %1677 = vrot.lane.b32.xlu0 %v1663, 96
        %v1678 = vpop.permute.xlu0 %1677
        %1679 = vrot.lane.b32.xlu0 %v1664, 96
        %v1680 = vpop.permute.xlu0 %1679
        %1681 = vrot.lane.b32.xlu0 %v1665, 96
        %v1682 = vpop.permute.xlu0 %1681
        %1683 = vrot.lane.b32.xlu0 %v1666, 96
        %v1684 = vpop.permute.xlu0 %1683
        %1685 = vrot.lane.b32.xlu0 %v1667, 96
        %v1686 = vpop.permute.xlu0 %1685
        %1687 = vrot.lane.b32.xlu0 %v1668, 96
        %v1688 = vpop.permute.xlu0 %1687
        %vm1689 = vcmask 785408
        %v1690 = vsel %vm1689, %v1678, %v1680
        %v1691 = vsel %vm1689, %v1680, %v1682
        %v1692 = vsel %vm1689, %v1684, %v1686
        %v1693 = vsel %vm1689, %v1686, %v1688
        %v1699 = vsel %vm681, %v1670, 0
        %1701 = vmatprep.subr.bf16.mxu0 %v1691
        %1702 = vmatpush1.bf16.msra.mxu0 %v1690
        %1703 = vmatprep.subr.bf16.mxu0 %v1693
        %1704 = vmatpush1.bf16.msra.mxu0 %v1692
        %1705 = vmatprep.subr.bf16.mxu0 0
        %1706 = vmatpush1.bf16.msra.mxu0 0
        %1707 = vmatprep.subr.bf16.mxu0 0
        %1708 = vmatpush1.bf16.msra.mxu0 0
        %1709 = vmatprep.subr.bf16.mxu0 0
        %1710 = vmatpush1.bf16.msra.mxu0 0
        %1711 = vmatprep.subr.bf16.mxu0 0
        %1712 = vmatpush1.bf16.msra.mxu0 0
        %1713 = vmatprep.subr.bf16.mxu0 0
        %1714 = vmatpush1.bf16.msra.mxu0 0
        %1715 = vmatprep.subr.bf16.mxu0 0
        %1716 = vmatpush1.bf16.msra.mxu0 0
        %1717 = vmatprep.subr.bf16.mxu0 0
        %1718 = vmatpush1.bf16.msra.mxu0 0
        %1719 = vmatprep.subr.bf16.mxu0 0
        %1720 = vmatpush1.bf16.msra.mxu0 0
        %1721 = vmatprep.subr.bf16.mxu0 0
        %1722 = vmatpush1.bf16.msra.mxu0 0
        %1723 = vmatprep.subr.bf16.mxu0 0
        %1724 = vmatpush1.bf16.msra.mxu0 0
        %1725 = vmatprep.subr.bf16.mxu0 0
        %1726 = vmatpush1.bf16.msra.mxu0 0
        %1727 = vmatprep.subr.bf16.mxu0 0
        %1728 = vmatpush1.bf16.msra.mxu0 0
        %1729 = vmatprep.subr.bf16.mxu0 0
        %1730 = vmatpush1.bf16.msra.mxu0 0
        %1731 = vmatprep.subr.bf16.mxu0 0
        %1732 = vmatpush1.bf16.msra.mxu0 0
        %1733 = vmatprep.mubr.bf16.mxu0 0
        %1734 = vmatmul.mubr.bf16.gmra.mrb[0].mxu0 %v1699
        %v1735 = vpop.f32.mrb[0].mxu0
        %v1736 = vadd.f32 0.0, %v1735
        %v1737 = vpop.f32.mrb[0].mxu0
        %v1738 = vadd.f32 0.0, %v1737
        %v1739 = vpop.f32.mrb[0].mxu0
        %v1740 = vpop.f32.mrb[0].mxu0
        %1741 = vdwg.mxu0
        %v1744 = vcombine.low %v1736, %v1738
        %v1746 = vunpack.c.l.s4 1983009808
        %v1747 = vunpack.c.0.s8 %v1746
        %v1748 = vlaneseq
        %v1749 = vshrl.u32 %v1748, 7
        %v1750 = vsub.s32 %v1747, %v1749
        %v1751 = vrot.slane %v1744, %v1750
        %v1753 = vadd.f32 %v1612, %v1751
        %s1754 = scalar_lea.vmem %s428, 14
        %v1755 = vld [vmem:[%s1754] sm:$0x3]
        %v1758 = vunpack.c.l.s4 1966171168
        %v1759 = vunpack.c.0.s8 %v1758
        %v1760 = vlaneseq
        %v1761 = vshrl.u32 %v1760, 7
        %v1762 = vsub.s32 %v1759, %v1761
        %v1763 = vrot.slane %v1755, %v1762
        %v1764 = vcombine.high %v1763, %v1763
        %v1766 = vunpack.c.l.s4 1966171168
        %v1767 = vunpack.c.0.s8 %v1766
        %v1768 = vlaneseq
        %v1769 = vshrl.u32 %v1768, 7
        %v1770 = vsub.s32 %v1767, %v1769
        %v1771 = vrot.slane %v1763, %v1770
        %v1773 = vunpack.c.l.s4 1966171168
        %v1774 = vunpack.c.0.s8 %v1773
        %v1775 = vlaneseq
        %v1776 = vshrl.u32 %v1775, 7
        %v1777 = vsub.s32 %v1774, %v1776
        %v1778 = vrot.slane %v1764, %v1777
        %v1780 = vpack.i.b16 %v1771, %v1771
        %v1782 = vlaneseq
        %v1783 = vshrl.u32 %v1782, 7
        %v1784 = vsub.s32 0, %v1783
        %v1785 = vrot.slane %v1780, %v1784
        %v1787 = vpack.i.b16 %v1778, %v1778
        %v1789 = vlaneseq
        %v1790 = vshrl.u32 %v1789, 7
        %v1791 = vsub.s32 0, %v1790
        %v1792 = vrot.slane %v1787, %v1791
        %1795 = vrot.lane.b32.xlu0 %v1785, 33
        %v1796 = vpop.permute.xlu0 %1795
        %1797 = vrot.lane.b32.xlu0 %v1792, 33
        %v1798 = vpop.permute.xlu0 %1797
        %vm1799 = vcmask 269312
        %v1800 = vsel %vm1799, %v1796, %v1798
        %v1804 = vmul.bf16 %v802, %v1796
        %v1805 = vmul.bf16 %v803, %v1800
        %v1806 = vmul.bf16 %v804, %v1798
        %v1807 = vmul.bf16 %v805, %v1796
        %v1808 = vmul.bf16 %v806, %v1800
        %v1809 = vmul.bf16 %v807, %v1798
        %s1810 = scalar_lea.vmem %s6, 7
        %v1811 = vld [vmem:[%s1810] sm:$0x1]
        %1818 = vrot.lane.b32.xlu0 %v1804, 95
        %v1819 = vpop.permute.xlu0 %1818
        %1820 = vrot.lane.b32.xlu0 %v1805, 95
        %v1821 = vpop.permute.xlu0 %1820
        %1822 = vrot.lane.b32.xlu0 %v1806, 95
        %v1823 = vpop.permute.xlu0 %1822
        %1824 = vrot.lane.b32.xlu0 %v1807, 95
        %v1825 = vpop.permute.xlu0 %1824
        %1826 = vrot.lane.b32.xlu0 %v1808, 95
        %v1827 = vpop.permute.xlu0 %1826
        %1828 = vrot.lane.b32.xlu0 %v1809, 95
        %v1829 = vpop.permute.xlu0 %1828
        %vm1830 = vcmask 777216
        %v1831 = vsel %vm1830, %v1819, %v1821
        %v1832 = vsel %vm1830, %v1821, %v1823
        %v1833 = vsel %vm1830, %v1825, %v1827
        %v1834 = vsel %vm1830, %v1827, %v1829
        %v1840 = vsel %vm681, %v1811, 0
        %1842 = vmatprep.subr.bf16.mxu0 %v1832
        %1843 = vmatpush1.bf16.msra.mxu0 %v1831
        %1844 = vmatprep.subr.bf16.mxu0 %v1834
        %1845 = vmatpush1.bf16.msra.mxu0 %v1833
        %1846 = vmatprep.subr.bf16.mxu0 0
        %1847 = vmatpush1.bf16.msra.mxu0 0
        %1848 = vmatprep.subr.bf16.mxu0 0
        %1849 = vmatpush1.bf16.msra.mxu0 0
        %1850 = vmatprep.subr.bf16.mxu0 0
        %1851 = vmatpush1.bf16.msra.mxu0 0
        %1852 = vmatprep.subr.bf16.mxu0 0
        %1853 = vmatpush1.bf16.msra.mxu0 0
        %1854 = vmatprep.subr.bf16.mxu0 0
        %1855 = vmatpush1.bf16.msra.mxu0 0
        %1856 = vmatprep.subr.bf16.mxu0 0
        %1857 = vmatpush1.bf16.msra.mxu0 0
        %1858 = vmatprep.subr.bf16.mxu0 0
        %1859 = vmatpush1.bf16.msra.mxu0 0
        %1860 = vmatprep.subr.bf16.mxu0 0
        %1861 = vmatpush1.bf16.msra.mxu0 0
        %1862 = vmatprep.subr.bf16.mxu0 0
        %1863 = vmatpush1.bf16.msra.mxu0 0
        %1864 = vmatprep.subr.bf16.mxu0 0
        %1865 = vmatpush1.bf16.msra.mxu0 0
        %1866 = vmatprep.subr.bf16.mxu0 0
        %1867 = vmatpush1.bf16.msra.mxu0 0
        %1868 = vmatprep.subr.bf16.mxu0 0
        %1869 = vmatpush1.bf16.msra.mxu0 0
        %1870 = vmatprep.subr.bf16.mxu0 0
        %1871 = vmatpush1.bf16.msra.mxu0 0
        %1872 = vmatprep.subr.bf16.mxu0 0
        %1873 = vmatpush1.bf16.msra.mxu0 0
        %1874 = vmatprep.mubr.bf16.mxu0 0
        %1875 = vmatmul.mubr.bf16.gmra.mrb[0].mxu0 %v1840
        %v1876 = vpop.f32.mrb[0].mxu0
        %v1877 = vadd.f32 0.0, %v1876
        %v1878 = vpop.f32.mrb[0].mxu0
        %v1879 = vadd.f32 0.0, %v1878
        %v1880 = vpop.f32.mrb[0].mxu0
        %v1881 = vpop.f32.mrb[0].mxu0
        %1882 = vdwg.mxu0
        %v1885 = vcombine.low %v1877, %v1879
        %v1887 = vunpack.c.l.s4 1983009808
        %v1888 = vunpack.c.0.s8 %v1887
        %v1889 = vlaneseq
        %v1890 = vshrl.u32 %v1889, 7
        %v1891 = vsub.s32 %v1888, %v1890
        %v1892 = vrot.slane %v1885, %v1891
        %v1894 = vadd.f32 %v1753, %v1892
        %s1895 = scalar_lea.vmem %s428, 16
        %v1896 = vld [vmem:[%s1895] sm:$0x3]
        %v1899 = vunpack.c.l.s4 1966171168
        %v1900 = vunpack.c.0.s8 %v1899
        %v1901 = vlaneseq
        %v1902 = vshrl.u32 %v1901, 7
        %v1903 = vsub.s32 %v1900, %v1902
        %v1904 = vrot.slane %v1896, %v1903
        %v1905 = vcombine.high %v1904, %v1904
        %v1907 = vunpack.c.l.s4 1966171168
        %v1908 = vunpack.c.0.s8 %v1907
        %v1909 = vlaneseq
        %v1910 = vshrl.u32 %v1909, 7
        %v1911 = vsub.s32 %v1908, %v1910
        %v1912 = vrot.slane %v1904, %v1911
        %v1914 = vunpack.c.l.s4 1966171168
        %v1915 = vunpack.c.0.s8 %v1914
        %v1916 = vlaneseq
        %v1917 = vshrl.u32 %v1916, 7
        %v1918 = vsub.s32 %v1915, %v1917
        %v1919 = vrot.slane %v1905, %v1918
        %v1921 = vpack.i.b16 %v1912, %v1912
        %v1923 = vlaneseq
        %v1924 = vshrl.u32 %v1923, 7
        %v1925 = vsub.s32 0, %v1924
        %v1926 = vrot.slane %v1921, %v1925
        %v1928 = vpack.i.b16 %v1919, %v1919
        %v1930 = vlaneseq
        %v1931 = vshrl.u32 %v1930, 7
        %v1932 = vsub.s32 0, %v1931
        %v1933 = vrot.slane %v1928, %v1932
        %1936 = vrot.lane.b32.xlu0 %v1926, 34
        %v1937 = vpop.permute.xlu0 %1936
        %1938 = vrot.lane.b32.xlu0 %v1933, 34
        %v1939 = vpop.permute.xlu0 %1938
        %vm1940 = vcmask 277504
        %v1941 = vsel %vm1940, %v1937, %v1939
        %v1945 = vmul.bf16 %v802, %v1937
        %v1946 = vmul.bf16 %v803, %v1941
        %v1947 = vmul.bf16 %v804, %v1939
        %v1948 = vmul.bf16 %v805, %v1937
        %v1949 = vmul.bf16 %v806, %v1941
        %v1950 = vmul.bf16 %v807, %v1939
        %s1951 = scalar_lea.vmem %s6, 8
        %v1952 = vld [vmem:[%s1951] sm:$0x1]
        %1959 = vrot.lane.b32.xlu0 %v1945, 94
        %v1960 = vpop.permute.xlu0 %1959
        %1961 = vrot.lane.b32.xlu0 %v1946, 94
        %v1962 = vpop.permute.xlu0 %1961
        %1963 = vrot.lane.b32.xlu0 %v1947, 94
        %v1964 = vpop.permute.xlu0 %1963
        %1965 = vrot.lane.b32.xlu0 %v1948, 94
        %v1966 = vpop.permute.xlu0 %1965
        %1967 = vrot.lane.b32.xlu0 %v1949, 94
        %v1968 = vpop.permute.xlu0 %1967
        %1969 = vrot.lane.b32.xlu0 %v1950, 94
        %v1970 = vpop.permute.xlu0 %1969
        %vm1971 = vcmask 769024
        %v1972 = vsel %vm1971, %v1960, %v1962
        %v1973 = vsel %vm1971, %v1962, %v1964
        %v1974 = vsel %vm1971, %v1966, %v1968
        %v1975 = vsel %vm1971, %v1968, %v1970
        %v1981 = vsel %vm681, %v1952, 0
        %1983 = vmatprep.subr.bf16.mxu0 %v1973
        %1984 = vmatpush1.bf16.msra.mxu0 %v1972
        %1985 = vmatprep.subr.bf16.mxu0 %v1975
        %1986 = vmatpush1.bf16.msra.mxu0 %v1974
        %1987 = vmatprep.subr.bf16.mxu0 0
        %1988 = vmatpush1.bf16.msra.mxu0 0
        %1989 = vmatprep.subr.bf16.mxu0 0
        %1990 = vmatpush1.bf16.msra.mxu0 0
        %1991 = vmatprep.subr.bf16.mxu0 0
        %1992 = vmatpush1.bf16.msra.mxu0 0
        %1993 = vmatprep.subr.bf16.mxu0 0
        %1994 = vmatpush1.bf16.msra.mxu0 0
        %1995 = vmatprep.subr.bf16.mxu0 0
        %1996 = vmatpush1.bf16.msra.mxu0 0
        %1997 = vmatprep.subr.bf16.mxu0 0
        %1998 = vmatpush1.bf16.msra.mxu0 0
        %1999 = vmatprep.subr.bf16.mxu0 0
        %2000 = vmatpush1.bf16.msra.mxu0 0
        %2001 = vmatprep.subr.bf16.mxu0 0
        %2002 = vmatpush1.bf16.msra.mxu0 0
        %2003 = vmatprep.subr.bf16.mxu0 0
        %2004 = vmatpush1.bf16.msra.mxu0 0
        %2005 = vmatprep.subr.bf16.mxu0 0
        %2006 = vmatpush1.bf16.msra.mxu0 0
        %2007 = vmatprep.subr.bf16.mxu0 0
        %2008 = vmatpush1.bf16.msra.mxu0 0
        %2009 = vmatprep.subr.bf16.mxu0 0
        %2010 = vmatpush1.bf16.msra.mxu0 0
        %2011 = vmatprep.subr.bf16.mxu0 0
        %2012 = vmatpush1.bf16.msra.mxu0 0
        %2013 = vmatprep.subr.bf16.mxu0 0
        %2014 = vmatpush1.bf16.msra.mxu0 0
        %2015 = vmatprep.mubr.bf16.mxu0 0
        %2016 = vmatmul.mubr.bf16.gmra.mrb[0].mxu0 %v1981
        %v2017 = vpop.f32.mrb[0].mxu0
        %v2018 = vadd.f32 0.0, %v2017
        %v2019 = vpop.f32.mrb[0].mxu0
        %v2020 = vadd.f32 0.0, %v2019
        %v2021 = vpop.f32.mrb[0].mxu0
        %v2022 = vpop.f32.mrb[0].mxu0
        %2023 = vdwg.mxu0
        %v2026 = vcombine.low %v2018, %v2020
        %v2028 = vunpack.c.l.s4 1983009808
        %v2029 = vunpack.c.0.s8 %v2028
        %v2030 = vlaneseq
        %v2031 = vshrl.u32 %v2030, 7
        %v2032 = vsub.s32 %v2029, %v2031
        %v2033 = vrot.slane %v2026, %v2032
        %v2035 = vadd.f32 %v1894, %v2033
        %v2036 = vld [vmem:[%s423] sm:$0xf]
        %v2037 = vadd.f32 %v2036, %v2035
        %2038 = vst [vmem:[%s405] sm:$0xf] %v2037
        %s2039 = sand.u32 %s258, 1
        %s2040 = scalar_lea.sflag [#allocation3], %s2039
        %s2041 = sand.u32 %s258, 1
        %s2042 = smul.addr %s2041, 4
        %s2043 = scalar_lea.vmem [#allocation2], %s2042
        // Predicated region
        $region57: #{tpu_custom_call.1} parent=55 // pred_check
          %p2044 = pneg %p268
        $region58: #{tpu_custom_call.1} parent=55 // pred_check_branch
          %2046 = sbr.rel (%p2044) target = $region60
        $region59: #{tpu_custom_call.1} parent=55 // pred_region
          %s2047 = smul.u32 2, %s28
          %s2049 = ssub.s32 64, 64
          %2050 = vsyncadd %s2040, %s2049
          %s2051 = smul.addr %s27, 2
          %s2052 = sadd.s32 %s2047, %s2051
          %s2053 = smul.addr %s2052, 32
          %s2054 = scalar_lea.hbm %s9, %s2053
          %s2056 = sshll.u32 %s2043, 4
          %s2057 = int_to_ptr.vmem [resolvable:$true] %s2056
          %2059 = dma.vmem_to_hbm [thread:$0]  %s2057, 64, %s2054, %s2040
        $region60: #{tpu_custom_call.1} parent=55 // pred_fallthru
          _
      $region56: #{tpu_custom_call.1} parent=5 // pred_fallthru
        _
      %p2060 = scmp.le.s32.totalorder 2, %s18
      // Predicated region
      $region61: #{tpu_custom_call.1} parent=5 // pred_check
        %p2061 = pneg %p2060
      $region62: #{tpu_custom_call.1} parent=5 // pred_check_branch
        %2063 = sbr.rel (%p2061) target = $region64
      $region63: #{tpu_custom_call.1} parent=5 // pred_region
        %s2064 = ssub.s32 %s18, 2
        // Predicated region
        $region65: #{tpu_custom_call.1} parent=63 // pred_check
          %p2065 = pneg %p274
        $region66: #{tpu_custom_call.1} parent=63 // pred_check_branch
          %2067 = sbr.rel (%p2065) target = $region68
        $region67: #{tpu_custom_call.1} parent=63 // pred_region
          %s2068 = sand.u32 %s259, 1
          %s2069 = scalar_lea.sflag [#allocation3], %s2068
          %s2070 = sand.u32 %s259, 1
          %s2071 = smul.addr %s2070, 4
          %s2072 = scalar_lea.vmem [#allocation2], %s2071
          %2073 = dma.done %s2069, 64
        $region68: #{tpu_custom_call.1} parent=63 // pred_fallthru
          _
      $region64: #{tpu_custom_call.1} parent=5 // pred_fallthru
        _
    $region6: #{tpu_custom_call.1} parent=1 // loop_footer
      %s22 = sadd.s32 1, %s18
    $region7: #{tpu_custom_call.1} parent=1 // loop_footer_branch
      %17 = sbr.rel target = $region3
    $region8: #{tpu_custom_call.1} parent=1 // loop_exit
      _
    %2074 = vsyncpa [#allocation3], 1
    %s2075 = scalar_lea.sflag [#allocation3], 1
    %2076 = vsyncpa %s2075, 1

</llo_original>
